<compile_context>
chip_gen: v6e
topology: v6e:2x2x1
jax: 0.10.0
libtpu: 0.0.40
codegen_flags: <defaults>
</compile_context>

<pallas_src>
import math

import jax
import jax.numpy as jnp
from jax.experimental import pallas as pl
from jax.experimental.pallas import tpu as pltpu


# ----------------------------------------------------------------------------
# Kernel
# ----------------------------------------------------------------------------
def _sigmoid_via_tanh(x):
    # sigmoid(x) == 0.5 * tanh(0.5 * x) + 0.5 : one EUP transcendental instead
    # of exp + reciprocal (EUP is the saturating slot once weights are resident).
    return 0.5 * jnp.tanh(0.5 * x) + 0.5


def _lstm_cell_kernel(x_ref, h_ref, c_ref, wx_ref, wh_ref, b_ref,
                      h_out_ref, c_out_ref):
    """Fused LSTM cell for one (batch tile, hidden tile) grid point.

    x_ref  : (tB, I)        raw input tile (f32)
    h_ref  : (tB, Hp)       full (padded) prev hidden tile (f32)
    c_ref  : (tB, tH)       prev cell tile for this hidden tile (f32)
    wx_ref : (I,  4*tH)     folded input weights for this hidden tile
    wh_ref : (Hp, 4*tH)     folded hidden weights for this hidden tile
    b_ref  : (1,  4*tH)     fused bias (bx + bh), f32
    outputs: h (tB, tH) f32, c (tB, tH) f32
    Gate layout inside the 4*tH columns: [i, f, g, o], each tH wide.
    """
    tH = h_out_ref.shape[-1]
    cdt = wx_ref.dtype  # compute dtype (bf16 fast path or f32 exact path)

    # Two MXU dots with f32 accumulation; on v7x the MRB accumulates the
    # second dot in place.  No activation concat, no extra VMEM temp.
    gates = (
        jnp.dot(x_ref[...].astype(cdt), wx_ref[...],
                preferred_element_type=jnp.float32)
        + jnp.dot(h_ref[...].astype(cdt), wh_ref[...],
                  preferred_element_type=jnp.float32)
        + b_ref[...]
    )

    # torch.chunk(.., 4, dim=1) order: [i, f, g, o]; slices are 128-aligned.
    i = _sigmoid_via_tanh(gates[:, 0 * tH:1 * tH])
    f = _sigmoid_via_tanh(gates[:, 1 * tH:2 * tH])
    g = jnp.tanh(gates[:, 2 * tH:3 * tH])
    o = _sigmoid_via_tanh(gates[:, 3 * tH:4 * tH])

    # Cell-state math stays in f32.
    c = f * c_ref[...] + i * g
    h_out_ref[...] = o * jnp.tanh(c)
    c_out_ref[...] = c


# ----------------------------------------------------------------------------
# Sizing helpers (generation aware)
# ----------------------------------------------------------------------------
def _round_up(x, m):
    return ((x + m - 1) // m) * m


def _vmem_capacity_bytes():
    """Physical VMEM of the current generation (64 MiB fallback = v7x)."""
    try:
        return int(pltpu.get_tpu_info().vmem_capacity_bytes)
    except Exception:
        return 64 * 1024 * 1024


def _choose_hidden_tile(input_size, hidden_padded, w_itemsize):
    """Largest 128-multiple divisor of Hp whose per-tile weight slab fits a
    conservative slice of VMEM (keeps everything resident even on v7x)."""
    budget = max(4 << 20, int(0.25 * _vmem_capacity_bytes()))
    cands = [hidden_padded] + [t for t in range(hidden_padded - 128, 0, -128)
                               if hidden_padded % t == 0]
    for t in cands:
        w_bytes = (input_size + hidden_padded) * 4 * t * w_itemsize + 4 * t * 4
        if w_bytes <= budget:
            return t
    return cands[-1]


def _vmem_estimate(tB, I, Hp, tH, w_itemsize, w_bufs):
    w_bytes = w_bufs * ((I + Hp) * 4 * tH * w_itemsize + 4 * tH * 4)
    io_bytes = 2 * tB * (I + Hp + tH) * 4      # double-buffered x / h / c tiles
    out_bytes = 2 * tB * 2 * tH * 4            # double-buffered h / c out tiles
    tmp_bytes = 4 * tB * 4 * tH * 4            # gates + elementwise temps
    return w_bytes + io_bytes + out_bytes + tmp_bytes


def _choose_batch_tile(B, I, Hp, tH, w_itemsize, w_bufs, budget):
    """MXU-filling batch tile (<=256), shrunk only if the VMEM budget demands."""
    tB = min(256, _round_up(max(B, 1), 8))
    tB = _round_up(tB, 8)
    while tB > 8 and _vmem_estimate(tB, I, Hp, tH, w_itemsize, w_bufs) > budget:
        tB = max(8, _round_up(tB // 2, 8))
    return tB


def _pad_2d(a, rows, cols):
    r, c = a.shape
    if r == rows and c == cols:
        return a
    return jnp.pad(a, ((0, rows - r), (0, cols - c)))


# ----------------------------------------------------------------------------
# One-time parameter preparation
# ----------------------------------------------------------------------------
def prepare_params(params, compute_dtype=jnp.bfloat16, hidden_tile=None):
    """Fold repeat_interleave into the weights, fuse biases, pad gate bands to
    128 lanes, and lay the weights out per hidden tile ([i,f,g,o] x tH blocks).

    params (PyTorch nn.Linear convention):
        wx (4H, 4I)  input_projectors.weight      bx (4H,)
        wh (4H, 4H)  hidden_projectors.weight     bh (4H,)
    """
    wx, bx, wh, bh = params["wx"], params["bx"], params["wh"], params["bh"]
    four_h, four_i = wx.shape
    H, I = four_h // 4, four_i // 4
    Hp = _round_up(H, 128)
    w_itemsize = jnp.dtype(compute_dtype).itemsize

    # gates_x[:, n] = sum_m x_rep[:, m] * wx[n, m],  x_rep[:, 4k+j] = x[:, k]
    #              = sum_k x[:, k] * (sum_j wx[n, 4k+j])
    wx_fold = wx.reshape(four_h, I, 4).sum(axis=2).T          # (I, 4H)
    wh_fold = wh.reshape(four_h, H, 4).sum(axis=2).T          # (H, 4H)
    b_fused = bx + bh                                         # (4H,)

    # Split into per-gate bands, pad each band's columns H -> Hp (lane-dense),
    # and pad wh's contraction rows H -> Hp (prev_h gets zero-padded to match).
    def band_pad(w, rows_to):
        rows = w.shape[0]
        wb = w.reshape(rows, 4, H)
        return jnp.pad(wb, ((0, rows_to - rows), (0, 0), (0, Hp - H)))

    wxb = band_pad(wx_fold, I)      # (I,  4, Hp)
    whb = band_pad(wh_fold, Hp)     # (Hp, 4, Hp)
    bb = jnp.pad(b_fused.reshape(4, H), ((0, 0), (0, Hp - H)))   # (4, Hp)

    if hidden_tile is None:
        tH = _choose_hidden_tile(I, Hp, w_itemsize)
    else:
        assert hidden_tile % 128 == 0 and Hp % hidden_tile == 0
        tH = hidden_tile
    nH = Hp // tH

    # Interleave columns per hidden tile: tile j holds [i, f, g, o] x tH.
    def interleave(wb):
        rows = wb.shape[0]
        w4 = wb.reshape(rows, 4, nH, tH)
        return jnp.transpose(w4, (0, 2, 1, 3)).reshape(rows, 4 * Hp)

    wx_k = interleave(wxb).astype(compute_dtype)                      # (I,  4Hp)
    wh_k = interleave(whb).astype(compute_dtype)                      # (Hp, 4Hp)
    b_k = jnp.transpose(bb.reshape(4, nH, tH), (1, 0, 2)).reshape(1, 4 * Hp)
    b_k = b_k.astype(jnp.float32)                                     # (1,  4Hp)

    return {"wx": wx_k, "wh": wh_k, "b": b_k,
            "input_size": I, "hidden_size": H,
            "hidden_padded": Hp, "hidden_tile": tH}


# ----------------------------------------------------------------------------
# Forward wrapper
# ----------------------------------------------------------------------------
def my_lstm_cell_forward(input_, prev_h, prev_c, prepared, mask=None):
    """Pallas-backed MyLSTMCell.forward.  `mask` is accepted (and ignored) to
    mirror the PyTorch signature — the original module never uses it either.
    prev_h / prev_c are aliased into the outputs when donated."""
    del mask
    wx, wh, b = prepared["wx"], prepared["wh"], prepared["b"]
    I, H = prepared["input_size"], prepared["hidden_size"]
    Hp, tH = prepared["hidden_padded"], prepared["hidden_tile"]
    nH = Hp // tH
    B = input_.shape[0]

    cap = _vmem_capacity_bytes()
    w_itemsize = jnp.dtype(wx.dtype).itemsize
    w_bufs = 1 if nH == 1 else 2              # constant weight block -> 1 buffer
    tB = _choose_batch_tile(B, I, Hp, tH, w_itemsize, w_bufs,
                            budget=int(0.6 * cap))
    B_pad = _round_up(B, tB)
    nB = B_pad // tB

    # Pad batch to a tile multiple and hidden to Hp (zeros; sliced off below).
    x_p = _pad_2d(input_.astype(jnp.float32), B_pad, I)
    h_p = _pad_2d(prev_h.astype(jnp.float32), B_pad, Hp)
    c_p = _pad_2d(prev_c.astype(jnp.float32), B_pad, Hp)

    est = _vmem_estimate(tB, I, Hp, tH, w_itemsize, w_bufs)
    # Generation-aware clamp: never request more than ~75% of physical VMEM.
    vmem_limit = int(min(max(2 * est, 32 << 20), int(0.75 * cap)))

    def build(single_buffer_weights):
        wkw = ({"pipeline_mode": pl.Buffered(1)}
               if single_buffer_weights else {})
        in_specs = [
            pl.BlockSpec((tB, I), lambda bi, j: (bi, 0)),            # x
            pl.BlockSpec((tB, Hp), lambda bi, j: (bi, 0)),           # prev_h (reused over j)
            pl.BlockSpec((tB, tH), lambda bi, j: (bi, j)),           # prev_c tile
            pl.BlockSpec((I, 4 * tH), lambda bi, j: (0, j), **wkw),  # wx (VMEM-resident)
            pl.BlockSpec((Hp, 4 * tH), lambda bi, j: (0, j), **wkw), # wh (VMEM-resident)
            pl.BlockSpec((1, 4 * tH), lambda bi, j: (0, j), **wkw),  # bias
        ]
        out_spec = pl.BlockSpec((tB, tH), lambda bi, j: (bi, j))
        return pl.pallas_call(
            _lstm_cell_kernel,
            out_shape=(jax.ShapeDtypeStruct((B_pad, Hp), jnp.float32),
                       jax.ShapeDtypeStruct((B_pad, Hp), jnp.float32)),
            grid_spec=pltpu.PrefetchScalarGridSpec(
                num_scalar_prefetch=0,
                grid=(nB, nH),
                in_specs=in_specs,
                out_specs=(out_spec, out_spec),
            ),
            # prev_h -> h_out, prev_c -> c_out (in-place when donated).
            input_output_aliases={1: 0, 2: 1},
            compiler_params=pltpu.CompilerParams(
                # Hidden-tile axis stays "arbitrary": with prev_h aliased to
                # h_out, sharding it across cores could race reads of prev_h
                # against writes of h_out for the same batch rows.
                dimension_semantics=("parallel", "arbitrary"),
                vmem_limit_bytes=vmem_limit,
            ),
        )

    use_single = nH == 1   # weight block index is constant over the whole grid
    try:
        h_pad, c_pad = build(use_single)(x_p, h_p, c_p, wx, wh, b)
    except Exception:
        if not use_single:
            raise
        # Fallback if this lowering rejects single-buffered (Buffered(1)) specs.
        h_pad, c_pad = build(False)(x_p, h_p, c_p, wx, wh, b)

    return h_pad[:B, :H], c_pad[:B, :H]


# ----------------------------------------------------------------------------
# Init + pure-JAX reference (mirrors the PyTorch module exactly)
# ----------------------------------------------------------------------------
def init_params(key, input_size, hidden_size, chunks=4):
    """PyTorch-default init: every parameter ~ U(-1/sqrt(H), 1/sqrt(H)),
    stored in PyTorch nn.Linear convention (weight is (out, in))."""
    stdv = 1.0 / math.sqrt(hidden_size)
    k_wx, k_bx, k_wh, k_bh = jax.random.split(key, 4)
    return {
        "wx": jax.random.uniform(k_wx, (hidden_size * chunks, input_size * chunks),
                                 jnp.float32, -stdv, stdv),
        "bx": jax.random.uniform(k_bx, (hidden_size * chunks,),
                                 jnp.float32, -stdv, stdv),
        "wh": jax.random.uniform(k_wh, (hidden_size * chunks, hidden_size * chunks),
                                 jnp.float32, -stdv, stdv),
        "bh": jax.random.uniform(k_bh, (hidden_size * chunks,),
                                 jnp.float32, -stdv, stdv),
    }


def _reference_forward(input_, prev_h, prev_c, params, chunks=4):
    """Mirrors MyLSTMCell.forward (repeat_interleave + two projections)."""
    x_rep = jnp.repeat(input_, chunks, axis=1)
    h_rep = jnp.repeat(prev_h, chunks, axis=1)
    gx = x_rep @ params["wx"].T + params["bx"]
    gh = h_rep @ params["wh"].T + params["bh"]
    ix, fx, ggx, ox = jnp.split(gx, 4, axis=1)
    ih, fh, ggh, oh = jnp.split(gh, 4, axis=1)
    i = jax.nn.sigmoid(ix + ih)
    f = jax.nn.sigmoid(fx + fh)
    g = jnp.tanh(ggx + ggh)
    o = jax.nn.sigmoid(ox + oh)
    c = f * prev_c + i * g
    h = o * jnp.tanh(c)
    return h, c


# ----------------------------------------------------------------------------
# Self-test
# ----------------------------------------------------------------------------
if __name__ == "__main__":
    key = jax.random.PRNGKey(0)
    (k_param, k_x, k_h, k_c,
     k_param2, k_x2, k_h2, k_c2) = jax.random.split(key, 8)

    # --- Test 1/2: module-sized shapes (B=2, I=16, H=32) ---------------------
    batch, input_size, hidden_size = 2, 16, 32
    params = init_params(k_param, input_size, hidden_size)
    x = jax.random.normal(k_x, (batch, input_size), jnp.float32)
    prev_h = jax.random.normal(k_h, (batch, hidden_size), jnp.float32)
    prev_c = jax.random.normal(k_c, (batch, hidden_size), jnp.float32)

    h_ref, c_ref = _reference_forward(x, prev_h, prev_c, params)

    # f32 weights: strict check that folding + fusion + padding is exact.
    prep_f32 = prepare_params(params, compute_dtype=jnp.float32)
    h32, c32 = my_lstm_cell_forward(x, prev_h, prev_c, prep_f32)
    jax.block_until_ready((h32, c32))
    assert h32.shape == (batch, hidden_size) and c32.shape == (batch, hidden_size)
    assert jnp.allclose(h32, h_ref, atol=1e-4), "h mismatch vs reference (f32)"
    assert jnp.allclose(c32, c_ref, atol=1e-4), "c mismatch vs reference (f32)"

    # bf16 weights (MXU-native fast path): looser tolerance.
    prep_bf16 = prepare_params(params, compute_dtype=jnp.bfloat16)
    h16, c16 = my_lstm_cell_forward(x, prev_h, prev_c, prep_bf16)
    jax.block_until_ready((h16, c16))
    assert jnp.allclose(h16, h_ref, atol=5e-2, rtol=5e-2), "h mismatch (bf16)"
    assert jnp.allclose(c16, c_ref, atol=5e-2, rtol=5e-2), "c mismatch (bf16)"

    # --- Test 3: ragged batch + multi hidden-tile grid (B=9, H=256, tH=128) --
    batch2, input2, hidden2 = 9, 16, 256
    params2 = init_params(k_param2, input2, hidden2)
    x2 = jax.random.normal(k_x2, (batch2, input2), jnp.float32)
    ph2 = jax.random.normal(k_h2, (batch2, hidden2), jnp.float32)
    pc2 = jax.random.normal(k_c2, (batch2, hidden2), jnp.float32)
    h_ref2, c_ref2 = _reference_forward(x2, ph2, pc2, params2)
    prep2 = prepare_params(params2, compute_dtype=jnp.float32, hidden_tile=128)
    h_o2, c_o2 = my_lstm_cell_forward(x2, ph2, pc2, prep2)
    jax.block_until_ready((h_o2, c_o2))
    assert h_o2.shape == (batch2, hidden2) and c_o2.shape == (batch2, hidden2)
    assert jnp.allclose(h_o2, h_ref2, atol=1e-4), "h mismatch (tiled hidden, f32)"
    assert jnp.allclose(c_o2, c_ref2, atol=1e-4), "c mismatch (tiled hidden, f32)"

    print("KERNEL_OK")
</pallas_src>

<mosaic_0001>
module attributes {stable_mosaic.version = 11 : i64} {
  func.func @_lstm_cell_kernel(%arg0: i32, %arg1: i32, %arg2: memref<8x16xf32, #tpu.memory_space<vmem>>, %arg3: memref<8x128xf32, #tpu.memory_space<vmem>>, %arg4: memref<8x128xf32, #tpu.memory_space<vmem>>, %arg5: memref<16x512xf32, #tpu.memory_space<vmem>>, %arg6: memref<128x512xf32, #tpu.memory_space<vmem>>, %arg7: memref<1x512xf32, #tpu.memory_space<vmem>>, %arg8: memref<8x128xf32, #tpu.memory_space<vmem>>, %arg9: memref<8x128xf32, #tpu.memory_space<vmem>>) attributes {dimension_semantics = [#tpu.dimension_semantics<parallel>, #tpu.dimension_semantics<arbitrary>], iteration_bounds = array<i64: 1, 1>, scalar_prefetch = 0 : i64, scratch_operands = 0 : i64, tpu.core_type = #tpu.core_type<tc>, window_params = [{transform_indices = @transform_0, window_bounds = array<i64: 8, 16>}, {transform_indices = @transform_1, window_bounds = array<i64: 8, 128>}, {transform_indices = @transform_2, window_bounds = array<i64: 8, 128>}, {pipeline_mode = #tpu.pipeline_mode<synchronous>, transform_indices = @transform_3, window_bounds = array<i64: 16, 512>}, {pipeline_mode = #tpu.pipeline_mode<synchronous>, transform_indices = @transform_4, window_bounds = array<i64: 128, 512>}, {pipeline_mode = #tpu.pipeline_mode<synchronous>, transform_indices = @transform_5, window_bounds = array<i64: 1, 512>}, {transform_indices = @transform_6, window_bounds = array<i64: 8, 128>}, {transform_indices = @transform_7, window_bounds = array<i64: 8, 128>}]} {
    %c0 = arith.constant 0 : index
    %c0_0 = arith.constant 0 : index
    %0 = vector.load %arg2[%c0, %c0_0] : memref<8x16xf32, #tpu.memory_space<vmem>>, vector<8x16xf32>
    %c0_1 = arith.constant 0 : index
    %c0_2 = arith.constant 0 : index
    %1 = vector.load %arg5[%c0_1, %c0_2] : memref<16x512xf32, #tpu.memory_space<vmem>>, vector<16x512xf32>
    %cst = arith.constant dense<0.000000e+00> : vector<8x512xf32>
    %2 = tpu.matmul %0, %1, %cst {dimension_numbers = #tpu.dot_dimension_numbers<[1], [0], [0], [1], [0, 0, 1, 1], [], []>} : vector<8x16xf32>, vector<16x512xf32>, vector<8x512xf32> -> vector<8x512xf32>
    %c0_3 = arith.constant 0 : index
    %c0_4 = arith.constant 0 : index
    %3 = vector.load %arg3[%c0_3, %c0_4] : memref<8x128xf32, #tpu.memory_space<vmem>>, vector<8x128xf32>
    %c0_5 = arith.constant 0 : index
    %c0_6 = arith.constant 0 : index
    %4 = vector.load %arg6[%c0_5, %c0_6] : memref<128x512xf32, #tpu.memory_space<vmem>>, vector<128x512xf32>
    %cst_7 = arith.constant dense<0.000000e+00> : vector<8x512xf32>
    %5 = tpu.matmul %3, %4, %cst_7 {dimension_numbers = #tpu.dot_dimension_numbers<[1], [0], [0], [1], [0, 0, 1, 1], [], []>} : vector<8x128xf32>, vector<128x512xf32>, vector<8x512xf32> -> vector<8x512xf32>
    %6 = arith.addf %2, %5 : vector<8x512xf32>
    %c0_8 = arith.constant 0 : index
    %c0_9 = arith.constant 0 : index
    %7 = vector.load %arg7[%c0_8, %c0_9] : memref<1x512xf32, #tpu.memory_space<vmem>>, vector<1x512xf32>
    %8 = vector.broadcast %7 : vector<1x512xf32> to vector<8x512xf32>
    %9 = arith.addf %6, %8 : vector<8x512xf32>
    %10 = vector.extract_strided_slice %9 {offsets = [0, 0], sizes = [8, 128], strides = [1, 1]} : vector<8x512xf32> to vector<8x128xf32>
    %cst_10 = arith.constant 5.000000e-01 : f32
    %11 = vector.broadcast %cst_10 : f32 to vector<8x128xf32>
    %12 = arith.mulf %11, %10 : vector<8x128xf32>
    %13 = math.tanh %12 : vector<8x128xf32>
    %cst_11 = arith.constant 5.000000e-01 : f32
    %14 = vector.broadcast %cst_11 : f32 to vector<8x128xf32>
    %15 = arith.mulf %14, %13 : vector<8x128xf32>
    %cst_12 = arith.constant 5.000000e-01 : f32
    %16 = vector.broadcast %cst_12 : f32 to vector<8x128xf32>
    %17 = arith.addf %15, %16 : vector<8x128xf32>
    %18 = vector.extract_strided_slice %9 {offsets = [0, 128], sizes = [8, 128], strides = [1, 1]} : vector<8x512xf32> to vector<8x128xf32>
    %cst_13 = arith.constant 5.000000e-01 : f32
    %19 = vector.broadcast %cst_13 : f32 to vector<8x128xf32>
    %20 = arith.mulf %19, %18 : vector<8x128xf32>
    %21 = math.tanh %20 : vector<8x128xf32>
    %cst_14 = arith.constant 5.000000e-01 : f32
    %22 = vector.broadcast %cst_14 : f32 to vector<8x128xf32>
    %23 = arith.mulf %22, %21 : vector<8x128xf32>
    %cst_15 = arith.constant 5.000000e-01 : f32
    %24 = vector.broadcast %cst_15 : f32 to vector<8x128xf32>
    %25 = arith.addf %23, %24 : vector<8x128xf32>
    %26 = vector.extract_strided_slice %9 {offsets = [0, 256], sizes = [8, 128], strides = [1, 1]} : vector<8x512xf32> to vector<8x128xf32>
    %27 = math.tanh %26 : vector<8x128xf32>
    %28 = vector.extract_strided_slice %9 {offsets = [0, 384], sizes = [8, 128], strides = [1, 1]} : vector<8x512xf32> to vector<8x128xf32>
    %cst_16 = arith.constant 5.000000e-01 : f32
    %29 = vector.broadcast %cst_16 : f32 to vector<8x128xf32>
    %30 = arith.mulf %29, %28 : vector<8x128xf32>
    %31 = math.tanh %30 : vector<8x128xf32>
    %cst_17 = arith.constant 5.000000e-01 : f32
    %32 = vector.broadcast %cst_17 : f32 to vector<8x128xf32>
    %33 = arith.mulf %32, %31 : vector<8x128xf32>
    %cst_18 = arith.constant 5.000000e-01 : f32
    %34 = vector.broadcast %cst_18 : f32 to vector<8x128xf32>
    %35 = arith.addf %33, %34 : vector<8x128xf32>
    %c0_19 = arith.constant 0 : index
    %c0_20 = arith.constant 0 : index
    %36 = vector.load %arg4[%c0_19, %c0_20] : memref<8x128xf32, #tpu.memory_space<vmem>>, vector<8x128xf32>
    %37 = arith.mulf %25, %36 : vector<8x128xf32>
    %38 = arith.mulf %17, %27 : vector<8x128xf32>
    %39 = arith.addf %37, %38 : vector<8x128xf32>
    %40 = math.tanh %39 : vector<8x128xf32>
    %41 = arith.mulf %35, %40 : vector<8x128xf32>
    %c0_21 = arith.constant 0 : index
    %c0_22 = arith.constant 0 : index
    %42 = vector.load %arg8[%c0_21, %c0_22] : memref<8x128xf32, #tpu.memory_space<vmem>>, vector<8x128xf32>
    tpu.vector_store %arg8[%c0_21, %c0_22], %41 {strides = array<i32>} : memref<8x128xf32, #tpu.memory_space<vmem>>, vector<8x128xf32>,
    %c0_23 = arith.constant 0 : index
    %c0_24 = arith.constant 0 : index
    %43 = vector.load %arg9[%c0_23, %c0_24] : memref<8x128xf32, #tpu.memory_space<vmem>>, vector<8x128xf32>
    tpu.vector_store %arg9[%c0_23, %c0_24], %39 {strides = array<i32>} : memref<8x128xf32, #tpu.memory_space<vmem>>, vector<8x128xf32>,
    return
  }
  func.func @transform_0(%arg0: i32, %arg1: i32) -> (i32, i32) {
    %c0_i32 = arith.constant 0 : i32
    %c0_i32_0 = arith.constant 0 : i32
    return %arg0, %c0_i32 : i32, i32
  }
  func.func @transform_1(%arg0: i32, %arg1: i32) -> (i32, i32) {
    %c0_i32 = arith.constant 0 : i32
    %c0_i32_0 = arith.constant 0 : i32
    return %arg0, %c0_i32 : i32, i32
  }
  func.func @transform_2(%arg0: i32, %arg1: i32) -> (i32, i32) {
    %c0_i32 = arith.constant 0 : i32
    return %arg0, %arg1 : i32, i32
  }
  func.func @transform_3(%arg0: i32, %arg1: i32) -> (i32, i32) {
    %c0_i32 = arith.constant 0 : i32
    %c0_i32_0 = arith.constant 0 : i32
    return %c0_i32, %arg1 : i32, i32
  }
  func.func @transform_4(%arg0: i32, %arg1: i32) -> (i32, i32) {
    %c0_i32 = arith.constant 0 : i32
    %c0_i32_0 = arith.constant 0 : i32
    return %c0_i32, %arg1 : i32, i32
  }
  func.func @transform_5(%arg0: i32, %arg1: i32) -> (i32, i32) {
    %c0_i32 = arith.constant 0 : i32
    %c0_i32_0 = arith.constant 0 : i32
    return %c0_i32, %arg1 : i32, i32
  }
  func.func @transform_6(%arg0: i32, %arg1: i32) -> (i32, i32) {
    %c0_i32 = arith.constant 0 : i32
    return %arg0, %arg1 : i32, i32
  }
  func.func @transform_7(%arg0: i32, %arg1: i32) -> (i32, i32) {
    %c0_i32 = arith.constant 0 : i32
    return %arg0, %arg1 : i32, i32
  }
}

module attributes {stable_mosaic.version = 11 : i64} {
  func.func @_lstm_cell_kernel(%arg0: i32, %arg1: i32, %arg2: memref<8x16xf32, #tpu.memory_space<vmem>>, %arg3: memref<8x128xf32, #tpu.memory_space<vmem>>, %arg4: memref<8x128xf32, #tpu.memory_space<vmem>>, %arg5: memref<16x512xf32, #tpu.memory_space<vmem>>, %arg6: memref<128x512xf32, #tpu.memory_space<vmem>>, %arg7: memref<1x512xf32, #tpu.memory_space<vmem>>, %arg8: memref<8x128xf32, #tpu.memory_space<vmem>>, %arg9: memref<8x128xf32, #tpu.memory_space<vmem>>) attributes {dimension_semantics = [#tpu.dimension_semantics<parallel>, #tpu.dimension_semantics<arbitrary>], iteration_bounds = array<i64: 1, 1>, scalar_prefetch = 0 : i64, scratch_operands = 0 : i64, tpu.core_type = #tpu.core_type<tc>, window_params = [{transform_indices = @transform_0, window_bounds = array<i64: 8, 16>}, {transform_indices = @transform_1, window_bounds = array<i64: 8, 128>}, {transform_indices = @transform_2, window_bounds = array<i64: 8, 128>}, {transform_indices = @transform_3, window_bounds = array<i64: 16, 512>}, {transform_indices = @transform_4, window_bounds = array<i64: 128, 512>}, {transform_indices = @transform_5, window_bounds = array<i64: 1, 512>}, {transform_indices = @transform_6, window_bounds = array<i64: 8, 128>}, {transform_indices = @transform_7, window_bounds = array<i64: 8, 128>}]} {
    %c0 = arith.constant 0 : index
    %c0_0 = arith.constant 0 : index
    %0 = vector.load %arg2[%c0, %c0_0] : memref<8x16xf32, #tpu.memory_space<vmem>>, vector<8x16xf32>
    %c0_1 = arith.constant 0 : index
    %c0_2 = arith.constant 0 : index
    %1 = vector.load %arg5[%c0_1, %c0_2] : memref<16x512xf32, #tpu.memory_space<vmem>>, vector<16x512xf32>
    %cst = arith.constant dense<0.000000e+00> : vector<8x512xf32>
    %2 = tpu.matmul %0, %1, %cst {dimension_numbers = #tpu.dot_dimension_numbers<[1], [0], [0], [1], [0, 0, 1, 1], [], []>} : vector<8x16xf32>, vector<16x512xf32>, vector<8x512xf32> -> vector<8x512xf32>
    %c0_3 = arith.constant 0 : index
    %c0_4 = arith.constant 0 : index
    %3 = vector.load %arg3[%c0_3, %c0_4] : memref<8x128xf32, #tpu.memory_space<vmem>>, vector<8x128xf32>
    %c0_5 = arith.constant 0 : index
    %c0_6 = arith.constant 0 : index
    %4 = vector.load %arg6[%c0_5, %c0_6] : memref<128x512xf32, #tpu.memory_space<vmem>>, vector<128x512xf32>
    %cst_7 = arith.constant dense<0.000000e+00> : vector<8x512xf32>
    %5 = tpu.matmul %3, %4, %cst_7 {dimension_numbers = #tpu.dot_dimension_numbers<[1], [0], [0], [1], [0, 0, 1, 1], [], []>} : vector<8x128xf32>, vector<128x512xf32>, vector<8x512xf32> -> vector<8x512xf32>
    %6 = arith.addf %2, %5 : vector<8x512xf32>
    %c0_8 = arith.constant 0 : index
    %c0_9 = arith.constant 0 : index
    %7 = vector.load %arg7[%c0_8, %c0_9] : memref<1x512xf32, #tpu.memory_space<vmem>>, vector<1x512xf32>
    %8 = vector.broadcast %7 : vector<1x512xf32> to vector<8x512xf32>
    %9 = arith.addf %6, %8 : vector<8x512xf32>
    %10 = vector.extract_strided_slice %9 {offsets = [0, 0], sizes = [8, 128], strides = [1, 1]} : vector<8x512xf32> to vector<8x128xf32>
    %cst_10 = arith.constant 5.000000e-01 : f32
    %11 = vector.broadcast %cst_10 : f32 to vector<8x128xf32>
    %12 = arith.mulf %11, %10 : vector<8x128xf32>
    %13 = math.tanh %12 : vector<8x128xf32>
    %cst_11 = arith.constant 5.000000e-01 : f32
    %14 = vector.broadcast %cst_11 : f32 to vector<8x128xf32>
    %15 = arith.mulf %14, %13 : vector<8x128xf32>
    %cst_12 = arith.constant 5.000000e-01 : f32
    %16 = vector.broadcast %cst_12 : f32 to vector<8x128xf32>
    %17 = arith.addf %15, %16 : vector<8x128xf32>
    %18 = vector.extract_strided_slice %9 {offsets = [0, 128], sizes = [8, 128], strides = [1, 1]} : vector<8x512xf32> to vector<8x128xf32>
    %cst_13 = arith.constant 5.000000e-01 : f32
    %19 = vector.broadcast %cst_13 : f32 to vector<8x128xf32>
    %20 = arith.mulf %19, %18 : vector<8x128xf32>
    %21 = math.tanh %20 : vector<8x128xf32>
    %cst_14 = arith.constant 5.000000e-01 : f32
    %22 = vector.broadcast %cst_14 : f32 to vector<8x128xf32>
    %23 = arith.mulf %22, %21 : vector<8x128xf32>
    %cst_15 = arith.constant 5.000000e-01 : f32
    %24 = vector.broadcast %cst_15 : f32 to vector<8x128xf32>
    %25 = arith.addf %23, %24 : vector<8x128xf32>
    %26 = vector.extract_strided_slice %9 {offsets = [0, 256], sizes = [8, 128], strides = [1, 1]} : vector<8x512xf32> to vector<8x128xf32>
    %27 = math.tanh %26 : vector<8x128xf32>
    %28 = vector.extract_strided_slice %9 {offsets = [0, 384], sizes = [8, 128], strides = [1, 1]} : vector<8x512xf32> to vector<8x128xf32>
    %cst_16 = arith.constant 5.000000e-01 : f32
    %29 = vector.broadcast %cst_16 : f32 to vector<8x128xf32>
    %30 = arith.mulf %29, %28 : vector<8x128xf32>
    %31 = math.tanh %30 : vector<8x128xf32>
    %cst_17 = arith.constant 5.000000e-01 : f32
    %32 = vector.broadcast %cst_17 : f32 to vector<8x128xf32>
    %33 = arith.mulf %32, %31 : vector<8x128xf32>
    %cst_18 = arith.constant 5.000000e-01 : f32
    %34 = vector.broadcast %cst_18 : f32 to vector<8x128xf32>
    %35 = arith.addf %33, %34 : vector<8x128xf32>
    %c0_19 = arith.constant 0 : index
    %c0_20 = arith.constant 0 : index
    %36 = vector.load %arg4[%c0_19, %c0_20] : memref<8x128xf32, #tpu.memory_space<vmem>>, vector<8x128xf32>
    %37 = arith.mulf %25, %36 : vector<8x128xf32>
    %38 = arith.mulf %17, %27 : vector<8x128xf32>
    %39 = arith.addf %37, %38 : vector<8x128xf32>
    %40 = math.tanh %39 : vector<8x128xf32>
    %41 = arith.mulf %35, %40 : vector<8x128xf32>
    %c0_21 = arith.constant 0 : index
    %c0_22 = arith.constant 0 : index
    %42 = vector.load %arg8[%c0_21, %c0_22] : memref<8x128xf32, #tpu.memory_space<vmem>>, vector<8x128xf32>
    tpu.vector_store %arg8[%c0_21, %c0_22], %41 {strides = array<i32>} : memref<8x128xf32, #tpu.memory_space<vmem>>, vector<8x128xf32>,
    %c0_23 = arith.constant 0 : index
    %c0_24 = arith.constant 0 : index
    %43 = vector.load %arg9[%c0_23, %c0_24] : memref<8x128xf32, #tpu.memory_space<vmem>>, vector<8x128xf32>
    tpu.vector_store %arg9[%c0_23, %c0_24], %39 {strides = array<i32>} : memref<8x128xf32, #tpu.memory_space<vmem>>, vector<8x128xf32>,
    return
  }
  func.func @transform_0(%arg0: i32, %arg1: i32) -> (i32, i32) {
    %c0_i32 = arith.constant 0 : i32
    %c0_i32_0 = arith.constant 0 : i32
    return %arg0, %c0_i32 : i32, i32
  }
  func.func @transform_1(%arg0: i32, %arg1: i32) -> (i32, i32) {
    %c0_i32 = arith.constant 0 : i32
    %c0_i32_0 = arith.constant 0 : i32
    return %arg0, %c0_i32 : i32, i32
  }
  func.func @transform_2(%arg0: i32, %arg1: i32) -> (i32, i32) {
    %c0_i32 = arith.constant 0 : i32
    return %arg0, %arg1 : i32, i32
  }
  func.func @transform_3(%arg0: i32, %arg1: i32) -> (i32, i32) {
    %c0_i32 = arith.constant 0 : i32
    %c0_i32_0 = arith.constant 0 : i32
    return %c0_i32, %arg1 : i32, i32
  }
  func.func @transform_4(%arg0: i32, %arg1: i32) -> (i32, i32) {
    %c0_i32 = arith.constant 0 : i32
    %c0_i32_0 = arith.constant 0 : i32
    return %c0_i32, %arg1 : i32, i32
  }
  func.func @transform_5(%arg0: i32, %arg1: i32) -> (i32, i32) {
    %c0_i32 = arith.constant 0 : i32
    %c0_i32_0 = arith.constant 0 : i32
    return %c0_i32, %arg1 : i32, i32
  }
  func.func @transform_6(%arg0: i32, %arg1: i32) -> (i32, i32) {
    %c0_i32 = arith.constant 0 : i32
    return %arg0, %arg1 : i32, i32
  }
  func.func @transform_7(%arg0: i32, %arg1: i32) -> (i32, i32) {
    %c0_i32 = arith.constant 0 : i32
    return %arg0, %arg1 : i32, i32
  }
}

</mosaic_0001>

<llo_original>
// kernel: tpu_custom_call.1
$region0: #{tpu_custom_call.1}
  #allocation0 [shape = 'u32[]', space=smem, size = 0x4, offset = 0x4, fixed_abs, tag = 'smem constant byte address 0x4 - core index']
  #allocation1 [shape = 'u32[144,128]{1,0:T(1,128)}', space=vmem, size = 0x12000, scoped, tag = 'internal scratch']
  %s0 = inlined_call_operand.vmem [shape: f32[8,16], index: 0, kind: input, shape index: {}]
  %s1 = inlined_call_operand.hbm [shape: f32[8,128], index: 1, kind: input, shape index: {}, may-alias: {1,6}]
  %s2 = inlined_call_operand.hbm [shape: f32[8,128], index: 2, kind: input, shape index: {}, may-alias: {2,7}]
  %s3 = inlined_call_operand.hbm [shape: f32[16,512], index: 3, kind: input, shape index: {}]
  %s4 = inlined_call_operand.hbm [shape: f32[128,512], index: 4, kind: input, shape index: {}]
  %s5 = inlined_call_operand.vmem [shape: f32[1,512], index: 5, kind: input, shape index: {}]
  %s6 = inlined_call_operand.hbm [shape: f32[8,128], index: 6, kind: output, shape index: {0}, may-alias: {1,6}]
  %s7 = inlined_call_operand.hbm [shape: f32[8,128], index: 7, kind: output, shape index: {1}, may-alias: {2,7}]
  %8 = xla_tuple %s6, %s7
  %s9 = sld [smem:[#allocation0]]
  $region58: #{tpu_custom_call.1} parent=0
    _
  %s11 = ssub.s32 1, %s9
  %s12 = scalar_select 0, %s11, %s9
  $region1: #{tpu_custom_call.1} parent=0
    #allocation2 [shape = 'u8[4096]{0}', space=vmem, size = 0x1000, scoped, tag = 'input window, operand 1, single buffered']
    #allocation3 [shape = 's32[1]{0}', space=sflag, size = 0x4, scoped, tag = 'scoped memory for tpu_custom_call.1']
    #allocation4 [shape = 's32[1]{0}', space=sflag, size = 0x4, scoped, tag = 'scoped memory for tpu_custom_call.1']
    #allocation5 [shape = 'u8[4096]{0}', space=vmem, size = 0x1000, scoped, tag = 'input window, operand 2, single buffered']
    #allocation6 [shape = 's32[1]{0}', space=sflag, size = 0x4, scoped, tag = 'scoped memory for tpu_custom_call.1']
    #allocation7 [shape = 'u8[32768]{0}', space=vmem, size = 0x8000, scoped, tag = 'input window, operand 3, single buffered']
    #allocation8 [shape = 'u8[262144]{0}', space=vmem, size = 0x40000, scoped, tag = 'input window, operand 4, single buffered']
    #allocation9 [shape = 's32[1]{0}', space=sflag, size = 0x4, scoped, tag = 'scoped memory for tpu_custom_call.1']
    #allocation10 [shape = 'u8[4096]{0}', space=vmem, size = 0x1000, scoped, tag = 'output window, operand 0, single buffered']
    #allocation11 [shape = 'u8[4096]{0}', space=vmem, size = 0x1000, scoped, tag = 'output window, operand 1, single buffered']
    #allocation12 [shape = 's32[1]{0}', space=sflag, size = 0x4, scoped, tag = 'scoped memory for tpu_custom_call.1']
    %13 = vsyncpa [#allocation3], 0
    %14 = vsyncpa [#allocation6], 0
    %15 = vsyncpa [#allocation9], 0
    %16 = vsyncpa [#allocation4], 0
    %17 = vsyncpa [#allocation12], 0
    // Predicated region
    $region2: #{tpu_custom_call.1} parent=1 // pred_check
      _
    $region3: #{tpu_custom_call.1} parent=1 // pred_check_branch
      %19 = sbr.rel (0) target = $region5
    $region4: #{tpu_custom_call.1} parent=1 // pred_region
      _
    $region5: #{tpu_custom_call.1} parent=1 // pred_fallthru
      _
    // Predicated region
    $region6: #{tpu_custom_call.1} parent=1 // pred_check
      _
    $region7: #{tpu_custom_call.1} parent=1 // pred_check_branch
      %21 = sbr.rel (0) target = $region9
    $region8: #{tpu_custom_call.1} parent=1 // pred_region
      %s23 = ssub.s32 128, 128
      %24 = vsyncadd [#allocation3], %s23
      %s26 = sshll.u32 [#allocation2], 4
      %s27 = int_to_ptr.vmem [resolvable:$true] %s26
      %29 = dma.hbm_to_vmem [thread:$0]  %s1, 128, %s27, [#allocation3]
    $region9: #{tpu_custom_call.1} parent=1 // pred_fallthru
      _
    // Predicated region
    $region10: #{tpu_custom_call.1} parent=1 // pred_check
      _
    $region11: #{tpu_custom_call.1} parent=1 // pred_check_branch
      %31 = sbr.rel (0) target = $region13
    $region12: #{tpu_custom_call.1} parent=1 // pred_region
      %s33 = ssub.s32 128, 128
      %34 = vsyncadd [#allocation6], %s33
      %s36 = sshll.u32 [#allocation5], 4
      %s37 = int_to_ptr.vmem [resolvable:$true] %s36
      %39 = dma.hbm_to_vmem [thread:$0]  %s2, 128, %s37, [#allocation6]
    $region13: #{tpu_custom_call.1} parent=1 // pred_fallthru
      _
    // Predicated region
    $region14: #{tpu_custom_call.1} parent=1 // pred_check
      _
    $region15: #{tpu_custom_call.1} parent=1 // pred_check_branch
      %41 = sbr.rel (0) target = $region17
    $region16: #{tpu_custom_call.1} parent=1 // pred_region
      %s43 = ssub.s32 1024, 1024
      %44 = vsyncadd [#allocation6], %s43
      %s45 = sshll.u32 [#allocation7], 4
      %s46 = int_to_ptr.vmem [resolvable:$true] %s45
      %51 = dma.hbm_to_vmem [thread:$0]  %s3, 1024, %s46, [#allocation6], 512, 512, 32
    $region17: #{tpu_custom_call.1} parent=1 // pred_fallthru
      _
    // Predicated region
    $region18: #{tpu_custom_call.1} parent=1 // pred_check
      _
    $region19: #{tpu_custom_call.1} parent=1 // pred_check_branch
      %53 = sbr.rel (0) target = $region21
    $region20: #{tpu_custom_call.1} parent=1 // pred_region
      %s55 = ssub.s32 8192, 8192
      %56 = vsyncadd [#allocation9], %s55
      %s57 = sshll.u32 [#allocation8], 4
      %s58 = int_to_ptr.vmem [resolvable:$true] %s57
      %63 = dma.hbm_to_vmem [thread:$0]  %s4, 8192, %s58, [#allocation9], 512, 512, 32
    $region21: #{tpu_custom_call.1} parent=1 // pred_fallthru
      _
    // Predicated region
    $region22: #{tpu_custom_call.1} parent=1 // pred_check
      _
    $region23: #{tpu_custom_call.1} parent=1 // pred_check_branch
      %65 = sbr.rel (0) target = $region25
    $region24: #{tpu_custom_call.1} parent=1 // pred_region
      _
    $region25: #{tpu_custom_call.1} parent=1 // pred_fallthru
      _
    // Predicated region
    $region26: #{tpu_custom_call.1} parent=1 // pred_check
      _
    $region27: #{tpu_custom_call.1} parent=1 // pred_check_branch
      %67 = sbr.rel (0) target = $region29
    $region28: #{tpu_custom_call.1} parent=1 // pred_region
      %68 = dma.done [#allocation3], 128
    $region29: #{tpu_custom_call.1} parent=1 // pred_fallthru
      _
    // Predicated region
    $region30: #{tpu_custom_call.1} parent=1 // pred_check
      _
    $region31: #{tpu_custom_call.1} parent=1 // pred_check_branch
      %70 = sbr.rel (0) target = $region33
    $region32: #{tpu_custom_call.1} parent=1 // pred_region
      %71 = dma.done [#allocation6], 128
    $region33: #{tpu_custom_call.1} parent=1 // pred_fallthru
      _
    // Predicated region
    $region34: #{tpu_custom_call.1} parent=1 // pred_check
      _
    $region35: #{tpu_custom_call.1} parent=1 // pred_check_branch
      %73 = sbr.rel (0) target = $region37
    $region36: #{tpu_custom_call.1} parent=1 // pred_region
      %74 = dma.done [#allocation6], 1024
    $region37: #{tpu_custom_call.1} parent=1 // pred_fallthru
      _
    // Predicated region
    $region38: #{tpu_custom_call.1} parent=1 // pred_check
      _
    $region39: #{tpu_custom_call.1} parent=1 // pred_check_branch
      %76 = sbr.rel (0) target = $region41
    $region40: #{tpu_custom_call.1} parent=1 // pred_region
      %77 = dma.done [#allocation9], 8192
    $region41: #{tpu_custom_call.1} parent=1 // pred_fallthru
      _
    %v78 = vld [vmem:[%s0] sm:$0xff]
    %v79 = vld [vmem:[#allocation7] sm:$0xff]
    %v80 = vld [vmem:[#allocation7 + $0x8] sm:$0xff]
    %v81 = vld [vmem:[#allocation7 + $0x10] sm:$0xff]
    %v82 = vld [vmem:[#allocation7 + $0x18] sm:$0xff]
    %v83 = vld [vmem:[#allocation7 + $0x20] sm:$0xff]
    %v84 = vld [vmem:[#allocation7 + $0x28] sm:$0xff]
    %v85 = vld [vmem:[#allocation7 + $0x30] sm:$0xff]
    %v86 = vld [vmem:[#allocation7 + $0x38] sm:$0xff]
    %v87 = vld [vmem:[#allocation2] sm:$0xff]
    %v88 = vld [vmem:[#allocation8] sm:$0xff]
    %v89 = vld [vmem:[#allocation8 + $0x8] sm:$0xff]
    %v90 = vld [vmem:[#allocation8 + $0x10] sm:$0xff]
    %v91 = vld [vmem:[#allocation8 + $0x18] sm:$0xff]
    %v92 = vld [vmem:[#allocation8 + $0x20] sm:$0xff]
    %v93 = vld [vmem:[#allocation8 + $0x28] sm:$0xff]
    %v94 = vld [vmem:[#allocation8 + $0x30] sm:$0xff]
    %v95 = vld [vmem:[#allocation8 + $0x38] sm:$0xff]
    %v96 = vld [vmem:[#allocation8 + $0x40] sm:$0xff]
    %v97 = vld [vmem:[#allocation8 + $0x48] sm:$0xff]
    %v98 = vld [vmem:[#allocation8 + $0x50] sm:$0xff]
    %v99 = vld [vmem:[#allocation8 + $0x58] sm:$0xff]
    %v100 = vld [vmem:[#allocation8 + $0x60] sm:$0xff]
    %v101 = vld [vmem:[#allocation8 + $0x68] sm:$0xff]
    %v102 = vld [vmem:[#allocation8 + $0x70] sm:$0xff]
    %v103 = vld [vmem:[#allocation8 + $0x78] sm:$0xff]
    %v104 = vld [vmem:[#allocation8 + $0x80] sm:$0xff]
    %v105 = vld [vmem:[#allocation8 + $0x88] sm:$0xff]
    %v106 = vld [vmem:[#allocation8 + $0x90] sm:$0xff]
    %v107 = vld [vmem:[#allocation8 + $0x98] sm:$0xff]
    %v108 = vld [vmem:[#allocation8 + $0xa0] sm:$0xff]
    %v109 = vld [vmem:[#allocation8 + $0xa8] sm:$0xff]
    %v110 = vld [vmem:[#allocation8 + $0xb0] sm:$0xff]
    %v111 = vld [vmem:[#allocation8 + $0xb8] sm:$0xff]
    %v112 = vld [vmem:[#allocation8 + $0xc0] sm:$0xff]
    %v113 = vld [vmem:[#allocation8 + $0xc8] sm:$0xff]
    %v114 = vld [vmem:[#allocation8 + $0xd0] sm:$0xff]
    %v115 = vld [vmem:[#allocation8 + $0xd8] sm:$0xff]
    %v116 = vld [vmem:[#allocation8 + $0xe0] sm:$0xff]
    %v117 = vld [vmem:[#allocation8 + $0xe8] sm:$0xff]
    %v118 = vld [vmem:[#allocation8 + $0xf0] sm:$0xff]
    %v119 = vld [vmem:[#allocation8 + $0xf8] sm:$0xff]
    %v120 = vld [vmem:[#allocation8 + $0x100] sm:$0xff]
    %v121 = vld [vmem:[#allocation8 + $0x108] sm:$0xff]
    %v122 = vld [vmem:[#allocation8 + $0x110] sm:$0xff]
    %v123 = vld [vmem:[#allocation8 + $0x118] sm:$0xff]
    %v124 = vld [vmem:[#allocation8 + $0x120] sm:$0xff]
    %v125 = vld [vmem:[#allocation8 + $0x128] sm:$0xff]
    %v126 = vld [vmem:[#allocation8 + $0x130] sm:$0xff]
    %v127 = vld [vmem:[#allocation8 + $0x138] sm:$0xff]
    %v128 = vld [vmem:[#allocation8 + $0x140] sm:$0xff]
    %v129 = vld [vmem:[#allocation8 + $0x148] sm:$0xff]
    %v130 = vld [vmem:[#allocation8 + $0x150] sm:$0xff]
    %v131 = vld [vmem:[#allocation8 + $0x158] sm:$0xff]
    %v132 = vld [vmem:[#allocation8 + $0x160] sm:$0xff]
    %v133 = vld [vmem:[#allocation8 + $0x168] sm:$0xff]
    %v134 = vld [vmem:[#allocation8 + $0x170] sm:$0xff]
    %v135 = vld [vmem:[#allocation8 + $0x178] sm:$0xff]
    %v136 = vld [vmem:[#allocation8 + $0x180] sm:$0xff]
    %v137 = vld [vmem:[#allocation8 + $0x188] sm:$0xff]
    %v138 = vld [vmem:[#allocation8 + $0x190] sm:$0xff]
    %v139 = vld [vmem:[#allocation8 + $0x198] sm:$0xff]
    %v140 = vld [vmem:[#allocation8 + $0x1a0] sm:$0xff]
    %v141 = vld [vmem:[#allocation8 + $0x1a8] sm:$0xff]
    %v142 = vld [vmem:[#allocation8 + $0x1b0] sm:$0xff]
    %v143 = vld [vmem:[#allocation8 + $0x1b8] sm:$0xff]
    %v144 = vld [vmem:[#allocation8 + $0x1c0] sm:$0xff]
    %v145 = vld [vmem:[#allocation8 + $0x1c8] sm:$0xff]
    %v146 = vld [vmem:[#allocation8 + $0x1d0] sm:$0xff]
    %v147 = vld [vmem:[#allocation8 + $0x1d8] sm:$0xff]
    %v148 = vld [vmem:[#allocation8 + $0x1e0] sm:$0xff]
    %v149 = vld [vmem:[#allocation8 + $0x1e8] sm:$0xff]
    %v150 = vld [vmem:[#allocation8 + $0x1f0] sm:$0xff]
    %v151 = vld [vmem:[#allocation8 + $0x1f8] sm:$0xff]
    %152 = vmatprep.subr.mxu0 %v149
    %153 = vmatpush1.msra.mxu0 %v148
    %154 = vmatprep.subr.mxu0 %v145
    %155 = vmatpush1.msra.mxu0 %v144
    %156 = vmatprep.subr.mxu0 %v141
    %157 = vmatpush1.msra.mxu0 %v140
    %158 = vmatprep.subr.mxu0 %v137
    %159 = vmatpush1.msra.mxu0 %v136
    %160 = vmatprep.subr.mxu0 %v133
    %161 = vmatpush1.msra.mxu0 %v132
    %162 = vmatprep.subr.mxu0 %v129
    %163 = vmatpush1.msra.mxu0 %v128
    %164 = vmatprep.subr.mxu0 %v125
    %165 = vmatpush1.msra.mxu0 %v124
    %166 = vmatprep.subr.mxu0 %v121
    %167 = vmatpush1.msra.mxu0 %v120
    %168 = vmatprep.subr.mxu0 %v117
    %169 = vmatpush1.msra.mxu0 %v116
    %170 = vmatprep.subr.mxu0 %v113
    %171 = vmatpush1.msra.mxu0 %v112
    %172 = vmatprep.subr.mxu0 %v109
    %173 = vmatpush1.msra.mxu0 %v108
    %174 = vmatprep.subr.mxu0 %v105
    %175 = vmatpush1.msra.mxu0 %v104
    %176 = vmatprep.subr.mxu0 %v101
    %177 = vmatpush1.msra.mxu0 %v100
    %178 = vmatprep.subr.mxu0 %v97
    %179 = vmatpush1.msra.mxu0 %v96
    %180 = vmatprep.subr.mxu0 %v93
    %181 = vmatpush1.msra.mxu0 %v92
    %182 = vmatprep.subr.mxu0 %v89
    %183 = vmatpush1.msra.mxu0 %v88
    %184 = vmatprep.subr.mxu0 0.0
    %185 = vmatpush2.msra.mxu0 0.0
    %186 = vmatprep.subr.mxu0 0.0
    %187 = vmatpush2.msra.mxu0 0.0
    %188 = vmatprep.subr.mxu0 0.0
    %189 = vmatpush2.msra.mxu0 0.0
    %190 = vmatprep.subr.mxu0 0.0
    %191 = vmatpush2.msra.mxu0 0.0
    %192 = vmatprep.subr.mxu0 0.0
    %193 = vmatpush2.msra.mxu0 0.0
    %194 = vmatprep.subr.mxu0 0.0
    %195 = vmatpush2.msra.mxu0 0.0
    %196 = vmatprep.subr.mxu0 0.0
    %197 = vmatpush2.msra.mxu0 0.0
    %198 = vmatprep.subr.mxu0 0.0
    %199 = vmatpush2.msra.mxu0 0.0
    %200 = vmatprep.subr.mxu0 0.0
    %201 = vmatpush2.msra.mxu0 0.0
    %202 = vmatprep.subr.mxu0 0.0
    %203 = vmatpush2.msra.mxu0 0.0
    %204 = vmatprep.subr.mxu0 0.0
    %205 = vmatpush2.msra.mxu0 0.0
    %206 = vmatprep.subr.mxu0 0.0
    %207 = vmatpush2.msra.mxu0 0.0
    %208 = vmatprep.subr.mxu0 0.0
    %209 = vmatpush2.msra.mxu0 0.0
    %210 = vmatprep.subr.mxu0 0.0
    %211 = vmatpush2.msra.mxu0 0.0
    %212 = vmatprep.subr.mxu0 0.0
    %213 = vmatpush2.msra.mxu0 0.0
    %214 = vmatprep.subr.mxu0 0.0
    %215 = vmatpush2.msra.mxu0 0.0
    %216 = vmatprep.mubr.f32.mxu0 0.0
    %217 = vmatmul.mubr.f32.gmra.mxu0 %v87
    %v218 = vpop.f32.mrf.mxu0
    %v219 = vadd.f32 0.0, %v218
    %v220 = vpop.f32.mrf.mxu0
    %v221 = vadd.f32 0.0, %v220
    %222 = vdwg.mxu0
    %223 = vmatprep.subr.mxu0 %v151
    %224 = vmatpush1.msra.mxu0 %v150
    %225 = vmatprep.subr.mxu0 %v147
    %226 = vmatpush1.msra.mxu0 %v146
    %227 = vmatprep.subr.mxu0 %v143
    %228 = vmatpush1.msra.mxu0 %v142
    %229 = vmatprep.subr.mxu0 %v139
    %230 = vmatpush1.msra.mxu0 %v138
    %231 = vmatprep.subr.mxu0 %v135
    %232 = vmatpush1.msra.mxu0 %v134
    %233 = vmatprep.subr.mxu0 %v131
    %234 = vmatpush1.msra.mxu0 %v130
    %235 = vmatprep.subr.mxu0 %v127
    %236 = vmatpush1.msra.mxu0 %v126
    %237 = vmatprep.subr.mxu0 %v123
    %238 = vmatpush1.msra.mxu0 %v122
    %239 = vmatprep.subr.mxu0 %v119
    %240 = vmatpush1.msra.mxu0 %v118
    %241 = vmatprep.subr.mxu0 %v115
    %242 = vmatpush1.msra.mxu0 %v114
    %243 = vmatprep.subr.mxu0 %v111
    %244 = vmatpush1.msra.mxu0 %v110
    %245 = vmatprep.subr.mxu0 %v107
    %246 = vmatpush1.msra.mxu0 %v106
    %247 = vmatprep.subr.mxu0 %v103
    %248 = vmatpush1.msra.mxu0 %v102
    %249 = vmatprep.subr.mxu0 %v99
    %250 = vmatpush1.msra.mxu0 %v98
    %251 = vmatprep.subr.mxu0 %v95
    %252 = vmatpush1.msra.mxu0 %v94
    %253 = vmatprep.subr.mxu0 %v91
    %254 = vmatpush1.msra.mxu0 %v90
    %255 = vmatprep.subr.mxu0 0.0
    %256 = vmatpush2.msra.mxu0 0.0
    %257 = vmatprep.subr.mxu0 0.0
    %258 = vmatpush2.msra.mxu0 0.0
    %259 = vmatprep.subr.mxu0 0.0
    %260 = vmatpush2.msra.mxu0 0.0
    %261 = vmatprep.subr.mxu0 0.0
    %262 = vmatpush2.msra.mxu0 0.0
    %263 = vmatprep.subr.mxu0 0.0
    %264 = vmatpush2.msra.mxu0 0.0
    %265 = vmatprep.subr.mxu0 0.0
    %266 = vmatpush2.msra.mxu0 0.0
    %267 = vmatprep.subr.mxu0 0.0
    %268 = vmatpush2.msra.mxu0 0.0
    %269 = vmatprep.subr.mxu0 0.0
    %270 = vmatpush2.msra.mxu0 0.0
    %271 = vmatprep.subr.mxu0 0.0
    %272 = vmatpush2.msra.mxu0 0.0
    %273 = vmatprep.subr.mxu0 0.0
    %274 = vmatpush2.msra.mxu0 0.0
    %275 = vmatprep.subr.mxu0 0.0
    %276 = vmatpush2.msra.mxu0 0.0
    %277 = vmatprep.subr.mxu0 0.0
    %278 = vmatpush2.msra.mxu0 0.0
    %279 = vmatprep.subr.mxu0 0.0
    %280 = vmatpush2.msra.mxu0 0.0
    %281 = vmatprep.subr.mxu0 0.0
    %282 = vmatpush2.msra.mxu0 0.0
    %283 = vmatprep.subr.mxu0 0.0
    %284 = vmatpush2.msra.mxu0 0.0
    %285 = vmatprep.subr.mxu0 0.0
    %286 = vmatpush2.msra.mxu0 0.0
    %287 = vmatprep.mubr.f32.mxu0 0.0
    %288 = vmatmul.mubr.f32.gmra.mxu0 %v87
    %v289 = vpop.f32.mrf.mxu0
    %v290 = vadd.f32 0.0, %v289
    %v291 = vpop.f32.mrf.mxu0
    %v292 = vadd.f32 0.0, %v291
    %293 = vdwg.mxu0
    %vm294 = vcmask 130048
    %v296 = vsel %vm294, %v78, 0
    %298 = vmatprep.subr.mxu0 0.0
    %299 = vmatpush1.msra.mxu0 0.0
    %300 = vmatprep.subr.mxu0 0.0
    %301 = vmatpush1.msra.mxu0 0.0
    %302 = vmatprep.subr.mxu0 0.0
    %303 = vmatpush1.msra.mxu0 0.0
    %304 = vmatprep.subr.mxu0 0.0
    %305 = vmatpush1.msra.mxu0 0.0
    %306 = vmatprep.subr.mxu0 0.0
    %307 = vmatpush1.msra.mxu0 0.0
    %308 = vmatprep.subr.mxu0 0.0
    %309 = vmatpush1.msra.mxu0 0.0
    %310 = vmatprep.subr.mxu0 0.0
    %311 = vmatpush1.msra.mxu0 0.0
    %312 = vmatprep.subr.mxu0 0.0
    %313 = vmatpush1.msra.mxu0 0.0
    %314 = vmatprep.subr.mxu0 0.0
    %315 = vmatpush1.msra.mxu0 0.0
    %316 = vmatprep.subr.mxu0 0.0
    %317 = vmatpush1.msra.mxu0 0.0
    %318 = vmatprep.subr.mxu0 0.0
    %319 = vmatpush1.msra.mxu0 0.0
    %320 = vmatprep.subr.mxu0 0.0
    %321 = vmatpush1.msra.mxu0 0.0
    %322 = vmatprep.subr.mxu0 0.0
    %323 = vmatpush1.msra.mxu0 0.0
    %324 = vmatprep.subr.mxu0 0.0
    %325 = vmatpush1.msra.mxu0 0.0
    %326 = vmatprep.subr.mxu0 %v84
    %327 = vmatpush1.msra.mxu0 %v83
    %328 = vmatprep.subr.mxu0 %v80
    %329 = vmatpush1.msra.mxu0 %v79
    %330 = vmatprep.subr.mxu0 0.0
    %331 = vmatpush2.msra.mxu0 0.0
    %332 = vmatprep.subr.mxu0 0.0
    %333 = vmatpush2.msra.mxu0 0.0
    %334 = vmatprep.subr.mxu0 0.0
    %335 = vmatpush2.msra.mxu0 0.0
    %336 = vmatprep.subr.mxu0 0.0
    %337 = vmatpush2.msra.mxu0 0.0
    %338 = vmatprep.subr.mxu0 0.0
    %339 = vmatpush2.msra.mxu0 0.0
    %340 = vmatprep.subr.mxu0 0.0
    %341 = vmatpush2.msra.mxu0 0.0
    %342 = vmatprep.subr.mxu0 0.0
    %343 = vmatpush2.msra.mxu0 0.0
    %344 = vmatprep.subr.mxu0 0.0
    %345 = vmatpush2.msra.mxu0 0.0
    %346 = vmatprep.subr.mxu0 0.0
    %347 = vmatpush2.msra.mxu0 0.0
    %348 = vmatprep.subr.mxu0 0.0
    %349 = vmatpush2.msra.mxu0 0.0
    %350 = vmatprep.subr.mxu0 0.0
    %351 = vmatpush2.msra.mxu0 0.0
    %352 = vmatprep.subr.mxu0 0.0
    %353 = vmatpush2.msra.mxu0 0.0
    %354 = vmatprep.subr.mxu0 0.0
    %355 = vmatpush2.msra.mxu0 0.0
    %356 = vmatprep.subr.mxu0 0.0
    %357 = vmatpush2.msra.mxu0 0.0
    %358 = vmatprep.subr.mxu0 0.0
    %359 = vmatpush2.msra.mxu0 0.0
    %360 = vmatprep.subr.mxu0 0.0
    %361 = vmatpush2.msra.mxu0 0.0
    %362 = vmatprep.mubr.f32.mxu0 0.0
    %363 = vmatmul.mubr.f32.gmra.mxu0 %v296
    %v364 = vpop.f32.mrf.mxu0
    %v365 = vadd.f32 %v219, %v364
    %v366 = vpop.f32.mrf.mxu0
    %v367 = vadd.f32 %v221, %v366
    %368 = vdwg.mxu0
    %369 = vmatprep.subr.mxu0 0.0
    %370 = vmatpush1.msra.mxu0 0.0
    %371 = vmatprep.subr.mxu0 0.0
    %372 = vmatpush1.msra.mxu0 0.0
    %373 = vmatprep.subr.mxu0 0.0
    %374 = vmatpush1.msra.mxu0 0.0
    %375 = vmatprep.subr.mxu0 0.0
    %376 = vmatpush1.msra.mxu0 0.0
    %377 = vmatprep.subr.mxu0 0.0
    %378 = vmatpush1.msra.mxu0 0.0
    %379 = vmatprep.subr.mxu0 0.0
    %380 = vmatpush1.msra.mxu0 0.0
    %381 = vmatprep.subr.mxu0 0.0
    %382 = vmatpush1.msra.mxu0 0.0
    %383 = vmatprep.subr.mxu0 0.0
    %384 = vmatpush1.msra.mxu0 0.0
    %385 = vmatprep.subr.mxu0 0.0
    %386 = vmatpush1.msra.mxu0 0.0
    %387 = vmatprep.subr.mxu0 0.0
    %388 = vmatpush1.msra.mxu0 0.0
    %389 = vmatprep.subr.mxu0 0.0
    %390 = vmatpush1.msra.mxu0 0.0
    %391 = vmatprep.subr.mxu0 0.0
    %392 = vmatpush1.msra.mxu0 0.0
    %393 = vmatprep.subr.mxu0 0.0
    %394 = vmatpush1.msra.mxu0 0.0
    %395 = vmatprep.subr.mxu0 0.0
    %396 = vmatpush1.msra.mxu0 0.0
    %397 = vmatprep.subr.mxu0 %v86
    %398 = vmatpush1.msra.mxu0 %v85
    %399 = vmatprep.subr.mxu0 %v82
    %400 = vmatpush1.msra.mxu0 %v81
    %401 = vmatprep.subr.mxu0 0.0
    %402 = vmatpush2.msra.mxu0 0.0
    %403 = vmatprep.subr.mxu0 0.0
    %404 = vmatpush2.msra.mxu0 0.0
    %405 = vmatprep.subr.mxu0 0.0
    %406 = vmatpush2.msra.mxu0 0.0
    %407 = vmatprep.subr.mxu0 0.0
    %408 = vmatpush2.msra.mxu0 0.0
    %409 = vmatprep.subr.mxu0 0.0
    %410 = vmatpush2.msra.mxu0 0.0
    %411 = vmatprep.subr.mxu0 0.0
    %412 = vmatpush2.msra.mxu0 0.0
    %413 = vmatprep.subr.mxu0 0.0
    %414 = vmatpush2.msra.mxu0 0.0
    %415 = vmatprep.subr.mxu0 0.0
    %416 = vmatpush2.msra.mxu0 0.0
    %417 = vmatprep.subr.mxu0 0.0
    %418 = vmatpush2.msra.mxu0 0.0
    %419 = vmatprep.subr.mxu0 0.0
    %420 = vmatpush2.msra.mxu0 0.0
    %421 = vmatprep.subr.mxu0 0.0
    %422 = vmatpush2.msra.mxu0 0.0
    %423 = vmatprep.subr.mxu0 0.0
    %424 = vmatpush2.msra.mxu0 0.0
    %425 = vmatprep.subr.mxu0 0.0
    %426 = vmatpush2.msra.mxu0 0.0
    %427 = vmatprep.subr.mxu0 0.0
    %428 = vmatpush2.msra.mxu0 0.0
    %429 = vmatprep.subr.mxu0 0.0
    %430 = vmatpush2.msra.mxu0 0.0
    %431 = vmatprep.subr.mxu0 0.0
    %432 = vmatpush2.msra.mxu0 0.0
    %433 = vmatprep.mubr.f32.mxu0 0.0
    %434 = vmatmul.mubr.f32.gmra.mxu0 %v296
    %v435 = vpop.f32.mrf.mxu0
    %v436 = vadd.f32 %v290, %v435
    %v437 = vpop.f32.mrf.mxu0
    %v438 = vadd.f32 %v292, %v437
    %439 = vdwg.mxu0
    %v440 = vld [vmem:[%s5] sm:$0xf]
    %v442 = vlaneseq
    %v443 = vshrl.u32 %v442, 7
    %v444 = vsub.s32 0, %v443
    %v445 = vrot.slane %v440, %v444
    %v446 = vlaneseq
    %v447 = vshrl.u32 %v446, 7
    %v448 = vsub.s32 1, %v447
    %v449 = vrot.slane %v440, %v448
    %v450 = vlaneseq
    %v451 = vshrl.u32 %v450, 7
    %v452 = vsub.s32 2, %v451
    %v453 = vrot.slane %v440, %v452
    %v454 = vlaneseq
    %v455 = vshrl.u32 %v454, 7
    %v456 = vsub.s32 3, %v455
    %v457 = vrot.slane %v440, %v456
    %v462 = vadd.f32 %v365, %v445
    %v463 = vadd.f32 %v367, %v449
    %v464 = vadd.f32 %v436, %v453
    %v465 = vadd.f32 %v438, %v457
    %v466 = vmul.f32 %v462, 0.5
    %v467 = vtanh.pop %v466
    %v468 = vmul.f32 %v467, 0.5
    %v469 = vadd.f32 %v468, 0.5
    %v470 = vmul.f32 %v463, 0.5
    %v471 = vtanh.pop %v470
    %v472 = vmul.f32 %v471, 0.5
    %v473 = vadd.f32 %v472, 0.5
    %v474 = vtanh.pop %v464
    %v475 = vmul.f32 %v465, 0.5
    %v476 = vtanh.pop %v475
    %v477 = vmul.f32 %v476, 0.5
    %v478 = vadd.f32 %v477, 0.5
    %v479 = vld [vmem:[#allocation5] sm:$0xff]
    %v480 = vmul.f32 %v473, %v479
    %v481 = vmul.f32 %v469, %v474
    %v482 = vadd.f32 %v480, %v481
    %v483 = vtanh.pop %v482
    %v484 = vmul.f32 %v478, %v483
    %485 = vst [vmem:[#allocation10] sm:$0xff] %v484
    %486 = vst [vmem:[#allocation11] sm:$0xff] %v482
    // Predicated region
    $region42: #{tpu_custom_call.1} parent=1 // pred_check
      _
    $region43: #{tpu_custom_call.1} parent=1 // pred_check_branch
      %488 = sbr.rel (0) target = $region45
    $region44: #{tpu_custom_call.1} parent=1 // pred_region
      %s490 = ssub.s32 128, 128
      %491 = vsyncadd [#allocation4], %s490
      %s493 = sshll.u32 [#allocation10], 4
      %s494 = int_to_ptr.vmem [resolvable:$true] %s493
      %496 = dma.vmem_to_hbm [thread:$0]  %s494, 128, %s6, [#allocation4]
    $region45: #{tpu_custom_call.1} parent=1 // pred_fallthru
      _
    // Predicated region
    $region46: #{tpu_custom_call.1} parent=1 // pred_check
      _
    $region47: #{tpu_custom_call.1} parent=1 // pred_check_branch
      %498 = sbr.rel (0) target = $region49
    $region48: #{tpu_custom_call.1} parent=1 // pred_region
      %s500 = ssub.s32 128, 128
      %501 = vsyncadd [#allocation12], %s500
      %s503 = sshll.u32 [#allocation11], 4
      %s504 = int_to_ptr.vmem [resolvable:$true] %s503
      %506 = dma.vmem_to_hbm [thread:$0]  %s504, 128, %s7, [#allocation12]
    $region49: #{tpu_custom_call.1} parent=1 // pred_fallthru
      _
    // Predicated region
    $region50: #{tpu_custom_call.1} parent=1 // pred_check
      _
    $region51: #{tpu_custom_call.1} parent=1 // pred_check_branch
      %508 = sbr.rel (0) target = $region53
    $region52: #{tpu_custom_call.1} parent=1 // pred_region
      %509 = dma.done [#allocation4], 128
    $region53: #{tpu_custom_call.1} parent=1 // pred_fallthru
      _
    // Predicated region
    $region54: #{tpu_custom_call.1} parent=1 // pred_check
      _
    $region55: #{tpu_custom_call.1} parent=1 // pred_check_branch
      %511 = sbr.rel (0) target = $region57
    $region56: #{tpu_custom_call.1} parent=1 // pred_region
      %512 = dma.done [#allocation12], 128
    $region57: #{tpu_custom_call.1} parent=1 // pred_fallthru
      _
    %513 = vsyncpa [#allocation3], 1
    %514 = vsyncpa [#allocation6], 1
    %515 = vsyncpa [#allocation9], 1
    %516 = vsyncpa [#allocation4], 1
    %517 = vsyncpa [#allocation12], 1

// kernel: tpu_custom_call.1
$region0: #{tpu_custom_call.1}
  #allocation0 [shape = 'u32[]', space=smem, size = 0x4, offset = 0x4, fixed_abs, tag = 'smem constant byte address 0x4 - core index']
  #allocation1 [shape = 'u32[144,128]{1,0:T(1,128)}', space=vmem, size = 0x12000, scoped, tag = 'internal scratch']
  %s0 = inlined_call_operand.vmem [shape: f32[8,16], index: 0, kind: input, shape index: {}]
  %s1 = inlined_call_operand.hbm [shape: f32[8,128], index: 1, kind: input, shape index: {}, may-alias: {1,6}]
  %s2 = inlined_call_operand.hbm [shape: f32[8,128], index: 2, kind: input, shape index: {}, may-alias: {2,7}]
  %s3 = inlined_call_operand.hbm [shape: f32[16,512], index: 3, kind: input, shape index: {}]
  %s4 = inlined_call_operand.hbm [shape: f32[128,512], index: 4, kind: input, shape index: {}]
  %s5 = inlined_call_operand.vmem [shape: f32[1,512], index: 5, kind: input, shape index: {}]
  %s6 = inlined_call_operand.hbm [shape: f32[8,128], index: 6, kind: output, shape index: {0}, may-alias: {1,6}]
  %s7 = inlined_call_operand.hbm [shape: f32[8,128], index: 7, kind: output, shape index: {1}, may-alias: {2,7}]
  %8 = xla_tuple %s6, %s7
  %s9 = sld [smem:[#allocation0]]
  $region58: #{tpu_custom_call.1} parent=0
    _
  %s11 = ssub.s32 1, %s9
  %s12 = scalar_select 0, %s11, %s9
  $region1: #{tpu_custom_call.1} parent=0
    #allocation2 [shape = 'u8[4096]{0}', space=vmem, size = 0x1000, scoped, tag = 'input window, operand 1, single buffered']
    #allocation3 [shape = 's32[1]{0}', space=sflag, size = 0x4, scoped, tag = 'scoped memory for tpu_custom_call.1']
    #allocation4 [shape = 's32[1]{0}', space=sflag, size = 0x4, scoped, tag = 'scoped memory for tpu_custom_call.1']
    #allocation5 [shape = 'u8[4096]{0}', space=vmem, size = 0x1000, scoped, tag = 'input window, operand 2, single buffered']
    #allocation6 [shape = 's32[1]{0}', space=sflag, size = 0x4, scoped, tag = 'scoped memory for tpu_custom_call.1']
    #allocation7 [shape = 'u8[32768]{0}', space=vmem, size = 0x8000, scoped, tag = 'input window, operand 3, single buffered']
    #allocation8 [shape = 'u8[262144]{0}', space=vmem, size = 0x40000, scoped, tag = 'input window, operand 4, single buffered']
    #allocation9 [shape = 's32[1]{0}', space=sflag, size = 0x4, scoped, tag = 'scoped memory for tpu_custom_call.1']
    #allocation10 [shape = 'u8[4096]{0}', space=vmem, size = 0x1000, scoped, tag = 'output window, operand 0, single buffered']
    #allocation11 [shape = 'u8[4096]{0}', space=vmem, size = 0x1000, scoped, tag = 'output window, operand 1, single buffered']
    #allocation12 [shape = 's32[1]{0}', space=sflag, size = 0x4, scoped, tag = 'scoped memory for tpu_custom_call.1']
    %13 = vsyncpa [#allocation3], 0
    %14 = vsyncpa [#allocation6], 0
    %15 = vsyncpa [#allocation9], 0
    %16 = vsyncpa [#allocation4], 0
    %17 = vsyncpa [#allocation12], 0
    // Predicated region
    $region2: #{tpu_custom_call.1} parent=1 // pred_check
      _
    $region3: #{tpu_custom_call.1} parent=1 // pred_check_branch
      %19 = sbr.rel (0) target = $region5
    $region4: #{tpu_custom_call.1} parent=1 // pred_region
      _
    $region5: #{tpu_custom_call.1} parent=1 // pred_fallthru
      _
    // Predicated region
    $region6: #{tpu_custom_call.1} parent=1 // pred_check
      _
    $region7: #{tpu_custom_call.1} parent=1 // pred_check_branch
      %21 = sbr.rel (0) target = $region9
    $region8: #{tpu_custom_call.1} parent=1 // pred_region
      %s23 = ssub.s32 128, 128
      %24 = vsyncadd [#allocation3], %s23
      %s26 = sshll.u32 [#allocation2], 4
      %s27 = int_to_ptr.vmem [resolvable:$true] %s26
      %29 = dma.hbm_to_vmem [thread:$0]  %s1, 128, %s27, [#allocation3]
    $region9: #{tpu_custom_call.1} parent=1 // pred_fallthru
      _
    // Predicated region
    $region10: #{tpu_custom_call.1} parent=1 // pred_check
      _
    $region11: #{tpu_custom_call.1} parent=1 // pred_check_branch
      %31 = sbr.rel (0) target = $region13
    $region12: #{tpu_custom_call.1} parent=1 // pred_region
      %s33 = ssub.s32 128, 128
      %34 = vsyncadd [#allocation6], %s33
      %s36 = sshll.u32 [#allocation5], 4
      %s37 = int_to_ptr.vmem [resolvable:$true] %s36
      %39 = dma.hbm_to_vmem [thread:$0]  %s2, 128, %s37, [#allocation6]
    $region13: #{tpu_custom_call.1} parent=1 // pred_fallthru
      _
    // Predicated region
    $region14: #{tpu_custom_call.1} parent=1 // pred_check
      _
    $region15: #{tpu_custom_call.1} parent=1 // pred_check_branch
      %41 = sbr.rel (0) target = $region17
    $region16: #{tpu_custom_call.1} parent=1 // pred_region
      %s43 = ssub.s32 1024, 1024
      %44 = vsyncadd [#allocation6], %s43
      %s45 = sshll.u32 [#allocation7], 4
      %s46 = int_to_ptr.vmem [resolvable:$true] %s45
      %51 = dma.hbm_to_vmem [thread:$0]  %s3, 1024, %s46, [#allocation6], 512, 512, 32
    $region17: #{tpu_custom_call.1} parent=1 // pred_fallthru
      _
    // Predicated region
    $region18: #{tpu_custom_call.1} parent=1 // pred_check
      _
    $region19: #{tpu_custom_call.1} parent=1 // pred_check_branch
      %53 = sbr.rel (0) target = $region21
    $region20: #{tpu_custom_call.1} parent=1 // pred_region
      %s55 = ssub.s32 8192, 8192
      %56 = vsyncadd [#allocation9], %s55
      %s57 = sshll.u32 [#allocation8], 4
      %s58 = int_to_ptr.vmem [resolvable:$true] %s57
      %63 = dma.hbm_to_vmem [thread:$0]  %s4, 8192, %s58, [#allocation9], 512, 512, 32
    $region21: #{tpu_custom_call.1} parent=1 // pred_fallthru
      _
    // Predicated region
    $region22: #{tpu_custom_call.1} parent=1 // pred_check
      _
    $region23: #{tpu_custom_call.1} parent=1 // pred_check_branch
      %65 = sbr.rel (0) target = $region25
    $region24: #{tpu_custom_call.1} parent=1 // pred_region
      _
    $region25: #{tpu_custom_call.1} parent=1 // pred_fallthru
      _
    // Predicated region
    $region26: #{tpu_custom_call.1} parent=1 // pred_check
      _
    $region27: #{tpu_custom_call.1} parent=1 // pred_check_branch
      %67 = sbr.rel (0) target = $region29
    $region28: #{tpu_custom_call.1} parent=1 // pred_region
      %68 = dma.done [#allocation3], 128
    $region29: #{tpu_custom_call.1} parent=1 // pred_fallthru
      _
    // Predicated region
    $region30: #{tpu_custom_call.1} parent=1 // pred_check
      _
    $region31: #{tpu_custom_call.1} parent=1 // pred_check_branch
      %70 = sbr.rel (0) target = $region33
    $region32: #{tpu_custom_call.1} parent=1 // pred_region
      %71 = dma.done [#allocation6], 128
    $region33: #{tpu_custom_call.1} parent=1 // pred_fallthru
      _
    // Predicated region
    $region34: #{tpu_custom_call.1} parent=1 // pred_check
      _
    $region35: #{tpu_custom_call.1} parent=1 // pred_check_branch
      %73 = sbr.rel (0) target = $region37
    $region36: #{tpu_custom_call.1} parent=1 // pred_region
      %74 = dma.done [#allocation6], 1024
    $region37: #{tpu_custom_call.1} parent=1 // pred_fallthru
      _
    // Predicated region
    $region38: #{tpu_custom_call.1} parent=1 // pred_check
      _
    $region39: #{tpu_custom_call.1} parent=1 // pred_check_branch
      %76 = sbr.rel (0) target = $region41
    $region40: #{tpu_custom_call.1} parent=1 // pred_region
      %77 = dma.done [#allocation9], 8192
    $region41: #{tpu_custom_call.1} parent=1 // pred_fallthru
      _
    %v78 = vld [vmem:[%s0] sm:$0xff]
    %v79 = vld [vmem:[#allocation7] sm:$0xff]
    %v80 = vld [vmem:[#allocation7 + $0x8] sm:$0xff]
    %v81 = vld [vmem:[#allocation7 + $0x10] sm:$0xff]
    %v82 = vld [vmem:[#allocation7 + $0x18] sm:$0xff]
    %v83 = vld [vmem:[#allocation7 + $0x20] sm:$0xff]
    %v84 = vld [vmem:[#allocation7 + $0x28] sm:$0xff]
    %v85 = vld [vmem:[#allocation7 + $0x30] sm:$0xff]
    %v86 = vld [vmem:[#allocation7 + $0x38] sm:$0xff]
    %v87 = vld [vmem:[#allocation2] sm:$0xff]
    %v88 = vld [vmem:[#allocation8] sm:$0xff]
    %v89 = vld [vmem:[#allocation8 + $0x8] sm:$0xff]
    %v90 = vld [vmem:[#allocation8 + $0x10] sm:$0xff]
    %v91 = vld [vmem:[#allocation8 + $0x18] sm:$0xff]
    %v92 = vld [vmem:[#allocation8 + $0x20] sm:$0xff]
    %v93 = vld [vmem:[#allocation8 + $0x28] sm:$0xff]
    %v94 = vld [vmem:[#allocation8 + $0x30] sm:$0xff]
    %v95 = vld [vmem:[#allocation8 + $0x38] sm:$0xff]
    %v96 = vld [vmem:[#allocation8 + $0x40] sm:$0xff]
    %v97 = vld [vmem:[#allocation8 + $0x48] sm:$0xff]
    %v98 = vld [vmem:[#allocation8 + $0x50] sm:$0xff]
    %v99 = vld [vmem:[#allocation8 + $0x58] sm:$0xff]
    %v100 = vld [vmem:[#allocation8 + $0x60] sm:$0xff]
    %v101 = vld [vmem:[#allocation8 + $0x68] sm:$0xff]
    %v102 = vld [vmem:[#allocation8 + $0x70] sm:$0xff]
    %v103 = vld [vmem:[#allocation8 + $0x78] sm:$0xff]
    %v104 = vld [vmem:[#allocation8 + $0x80] sm:$0xff]
    %v105 = vld [vmem:[#allocation8 + $0x88] sm:$0xff]
    %v106 = vld [vmem:[#allocation8 + $0x90] sm:$0xff]
    %v107 = vld [vmem:[#allocation8 + $0x98] sm:$0xff]
    %v108 = vld [vmem:[#allocation8 + $0xa0] sm:$0xff]
    %v109 = vld [vmem:[#allocation8 + $0xa8] sm:$0xff]
    %v110 = vld [vmem:[#allocation8 + $0xb0] sm:$0xff]
    %v111 = vld [vmem:[#allocation8 + $0xb8] sm:$0xff]
    %v112 = vld [vmem:[#allocation8 + $0xc0] sm:$0xff]
    %v113 = vld [vmem:[#allocation8 + $0xc8] sm:$0xff]
    %v114 = vld [vmem:[#allocation8 + $0xd0] sm:$0xff]
    %v115 = vld [vmem:[#allocation8 + $0xd8] sm:$0xff]
    %v116 = vld [vmem:[#allocation8 + $0xe0] sm:$0xff]
    %v117 = vld [vmem:[#allocation8 + $0xe8] sm:$0xff]
    %v118 = vld [vmem:[#allocation8 + $0xf0] sm:$0xff]
    %v119 = vld [vmem:[#allocation8 + $0xf8] sm:$0xff]
    %v120 = vld [vmem:[#allocation8 + $0x100] sm:$0xff]
    %v121 = vld [vmem:[#allocation8 + $0x108] sm:$0xff]
    %v122 = vld [vmem:[#allocation8 + $0x110] sm:$0xff]
    %v123 = vld [vmem:[#allocation8 + $0x118] sm:$0xff]
    %v124 = vld [vmem:[#allocation8 + $0x120] sm:$0xff]
    %v125 = vld [vmem:[#allocation8 + $0x128] sm:$0xff]
    %v126 = vld [vmem:[#allocation8 + $0x130] sm:$0xff]
    %v127 = vld [vmem:[#allocation8 + $0x138] sm:$0xff]
    %v128 = vld [vmem:[#allocation8 + $0x140] sm:$0xff]
    %v129 = vld [vmem:[#allocation8 + $0x148] sm:$0xff]
    %v130 = vld [vmem:[#allocation8 + $0x150] sm:$0xff]
    %v131 = vld [vmem:[#allocation8 + $0x158] sm:$0xff]
    %v132 = vld [vmem:[#allocation8 + $0x160] sm:$0xff]
    %v133 = vld [vmem:[#allocation8 + $0x168] sm:$0xff]
    %v134 = vld [vmem:[#allocation8 + $0x170] sm:$0xff]
    %v135 = vld [vmem:[#allocation8 + $0x178] sm:$0xff]
    %v136 = vld [vmem:[#allocation8 + $0x180] sm:$0xff]
    %v137 = vld [vmem:[#allocation8 + $0x188] sm:$0xff]
    %v138 = vld [vmem:[#allocation8 + $0x190] sm:$0xff]
    %v139 = vld [vmem:[#allocation8 + $0x198] sm:$0xff]
    %v140 = vld [vmem:[#allocation8 + $0x1a0] sm:$0xff]
    %v141 = vld [vmem:[#allocation8 + $0x1a8] sm:$0xff]
    %v142 = vld [vmem:[#allocation8 + $0x1b0] sm:$0xff]
    %v143 = vld [vmem:[#allocation8 + $0x1b8] sm:$0xff]
    %v144 = vld [vmem:[#allocation8 + $0x1c0] sm:$0xff]
    %v145 = vld [vmem:[#allocation8 + $0x1c8] sm:$0xff]
    %v146 = vld [vmem:[#allocation8 + $0x1d0] sm:$0xff]
    %v147 = vld [vmem:[#allocation8 + $0x1d8] sm:$0xff]
    %v148 = vld [vmem:[#allocation8 + $0x1e0] sm:$0xff]
    %v149 = vld [vmem:[#allocation8 + $0x1e8] sm:$0xff]
    %v150 = vld [vmem:[#allocation8 + $0x1f0] sm:$0xff]
    %v151 = vld [vmem:[#allocation8 + $0x1f8] sm:$0xff]
    %152 = vmatprep.subr.mxu0 %v149
    %153 = vmatpush1.msra.mxu0 %v148
    %154 = vmatprep.subr.mxu0 %v145
    %155 = vmatpush1.msra.mxu0 %v144
    %156 = vmatprep.subr.mxu0 %v141
    %157 = vmatpush1.msra.mxu0 %v140
    %158 = vmatprep.subr.mxu0 %v137
    %159 = vmatpush1.msra.mxu0 %v136
    %160 = vmatprep.subr.mxu0 %v133
    %161 = vmatpush1.msra.mxu0 %v132
    %162 = vmatprep.subr.mxu0 %v129
    %163 = vmatpush1.msra.mxu0 %v128
    %164 = vmatprep.subr.mxu0 %v125
    %165 = vmatpush1.msra.mxu0 %v124
    %166 = vmatprep.subr.mxu0 %v121
    %167 = vmatpush1.msra.mxu0 %v120
    %168 = vmatprep.subr.mxu0 %v117
    %169 = vmatpush1.msra.mxu0 %v116
    %170 = vmatprep.subr.mxu0 %v113
    %171 = vmatpush1.msra.mxu0 %v112
    %172 = vmatprep.subr.mxu0 %v109
    %173 = vmatpush1.msra.mxu0 %v108
    %174 = vmatprep.subr.mxu0 %v105
    %175 = vmatpush1.msra.mxu0 %v104
    %176 = vmatprep.subr.mxu0 %v101
    %177 = vmatpush1.msra.mxu0 %v100
    %178 = vmatprep.subr.mxu0 %v97
    %179 = vmatpush1.msra.mxu0 %v96
    %180 = vmatprep.subr.mxu0 %v93
    %181 = vmatpush1.msra.mxu0 %v92
    %182 = vmatprep.subr.mxu0 %v89
    %183 = vmatpush1.msra.mxu0 %v88
    %184 = vmatprep.subr.mxu0 0.0
    %185 = vmatpush2.msra.mxu0 0.0
    %186 = vmatprep.subr.mxu0 0.0
    %187 = vmatpush2.msra.mxu0 0.0
    %188 = vmatprep.subr.mxu0 0.0
    %189 = vmatpush2.msra.mxu0 0.0
    %190 = vmatprep.subr.mxu0 0.0
    %191 = vmatpush2.msra.mxu0 0.0
    %192 = vmatprep.subr.mxu0 0.0
    %193 = vmatpush2.msra.mxu0 0.0
    %194 = vmatprep.subr.mxu0 0.0
    %195 = vmatpush2.msra.mxu0 0.0
    %196 = vmatprep.subr.mxu0 0.0
    %197 = vmatpush2.msra.mxu0 0.0
    %198 = vmatprep.subr.mxu0 0.0
    %199 = vmatpush2.msra.mxu0 0.0
    %200 = vmatprep.subr.mxu0 0.0
    %201 = vmatpush2.msra.mxu0 0.0
    %202 = vmatprep.subr.mxu0 0.0
    %203 = vmatpush2.msra.mxu0 0.0
    %204 = vmatprep.subr.mxu0 0.0
    %205 = vmatpush2.msra.mxu0 0.0
    %206 = vmatprep.subr.mxu0 0.0
    %207 = vmatpush2.msra.mxu0 0.0
    %208 = vmatprep.subr.mxu0 0.0
    %209 = vmatpush2.msra.mxu0 0.0
    %210 = vmatprep.subr.mxu0 0.0
    %211 = vmatpush2.msra.mxu0 0.0
    %212 = vmatprep.subr.mxu0 0.0
    %213 = vmatpush2.msra.mxu0 0.0
    %214 = vmatprep.subr.mxu0 0.0
    %215 = vmatpush2.msra.mxu0 0.0
    %216 = vmatprep.mubr.f32.mxu0 0.0
    %217 = vmatmul.mubr.f32.gmra.mxu0 %v87
    %v218 = vpop.f32.mrf.mxu0
    %v219 = vadd.f32 0.0, %v218
    %v220 = vpop.f32.mrf.mxu0
    %v221 = vadd.f32 0.0, %v220
    %222 = vdwg.mxu0
    %223 = vmatprep.subr.mxu0 %v151
    %224 = vmatpush1.msra.mxu0 %v150
    %225 = vmatprep.subr.mxu0 %v147
    %226 = vmatpush1.msra.mxu0 %v146
    %227 = vmatprep.subr.mxu0 %v143
    %228 = vmatpush1.msra.mxu0 %v142
    %229 = vmatprep.subr.mxu0 %v139
    %230 = vmatpush1.msra.mxu0 %v138
    %231 = vmatprep.subr.mxu0 %v135
    %232 = vmatpush1.msra.mxu0 %v134
    %233 = vmatprep.subr.mxu0 %v131
    %234 = vmatpush1.msra.mxu0 %v130
    %235 = vmatprep.subr.mxu0 %v127
    %236 = vmatpush1.msra.mxu0 %v126
    %237 = vmatprep.subr.mxu0 %v123
    %238 = vmatpush1.msra.mxu0 %v122
    %239 = vmatprep.subr.mxu0 %v119
    %240 = vmatpush1.msra.mxu0 %v118
    %241 = vmatprep.subr.mxu0 %v115
    %242 = vmatpush1.msra.mxu0 %v114
    %243 = vmatprep.subr.mxu0 %v111
    %244 = vmatpush1.msra.mxu0 %v110
    %245 = vmatprep.subr.mxu0 %v107
    %246 = vmatpush1.msra.mxu0 %v106
    %247 = vmatprep.subr.mxu0 %v103
    %248 = vmatpush1.msra.mxu0 %v102
    %249 = vmatprep.subr.mxu0 %v99
    %250 = vmatpush1.msra.mxu0 %v98
    %251 = vmatprep.subr.mxu0 %v95
    %252 = vmatpush1.msra.mxu0 %v94
    %253 = vmatprep.subr.mxu0 %v91
    %254 = vmatpush1.msra.mxu0 %v90
    %255 = vmatprep.subr.mxu0 0.0
    %256 = vmatpush2.msra.mxu0 0.0
    %257 = vmatprep.subr.mxu0 0.0
    %258 = vmatpush2.msra.mxu0 0.0
    %259 = vmatprep.subr.mxu0 0.0
    %260 = vmatpush2.msra.mxu0 0.0
    %261 = vmatprep.subr.mxu0 0.0
    %262 = vmatpush2.msra.mxu0 0.0
    %263 = vmatprep.subr.mxu0 0.0
    %264 = vmatpush2.msra.mxu0 0.0
    %265 = vmatprep.subr.mxu0 0.0
    %266 = vmatpush2.msra.mxu0 0.0
    %267 = vmatprep.subr.mxu0 0.0
    %268 = vmatpush2.msra.mxu0 0.0
    %269 = vmatprep.subr.mxu0 0.0
    %270 = vmatpush2.msra.mxu0 0.0
    %271 = vmatprep.subr.mxu0 0.0
    %272 = vmatpush2.msra.mxu0 0.0
    %273 = vmatprep.subr.mxu0 0.0
    %274 = vmatpush2.msra.mxu0 0.0
    %275 = vmatprep.subr.mxu0 0.0
    %276 = vmatpush2.msra.mxu0 0.0
    %277 = vmatprep.subr.mxu0 0.0
    %278 = vmatpush2.msra.mxu0 0.0
    %279 = vmatprep.subr.mxu0 0.0
    %280 = vmatpush2.msra.mxu0 0.0
    %281 = vmatprep.subr.mxu0 0.0
    %282 = vmatpush2.msra.mxu0 0.0
    %283 = vmatprep.subr.mxu0 0.0
    %284 = vmatpush2.msra.mxu0 0.0
    %285 = vmatprep.subr.mxu0 0.0
    %286 = vmatpush2.msra.mxu0 0.0
    %287 = vmatprep.mubr.f32.mxu0 0.0
    %288 = vmatmul.mubr.f32.gmra.mxu0 %v87
    %v289 = vpop.f32.mrf.mxu0
    %v290 = vadd.f32 0.0, %v289
    %v291 = vpop.f32.mrf.mxu0
    %v292 = vadd.f32 0.0, %v291
    %293 = vdwg.mxu0
    %vm294 = vcmask 130048
    %v296 = vsel %vm294, %v78, 0
    %298 = vmatprep.subr.mxu0 0.0
    %299 = vmatpush1.msra.mxu0 0.0
    %300 = vmatprep.subr.mxu0 0.0
    %301 = vmatpush1.msra.mxu0 0.0
    %302 = vmatprep.subr.mxu0 0.0
    %303 = vmatpush1.msra.mxu0 0.0
    %304 = vmatprep.subr.mxu0 0.0
    %305 = vmatpush1.msra.mxu0 0.0
    %306 = vmatprep.subr.mxu0 0.0
    %307 = vmatpush1.msra.mxu0 0.0
    %308 = vmatprep.subr.mxu0 0.0
    %309 = vmatpush1.msra.mxu0 0.0
    %310 = vmatprep.subr.mxu0 0.0
    %311 = vmatpush1.msra.mxu0 0.0
    %312 = vmatprep.subr.mxu0 0.0
    %313 = vmatpush1.msra.mxu0 0.0
    %314 = vmatprep.subr.mxu0 0.0
    %315 = vmatpush1.msra.mxu0 0.0
    %316 = vmatprep.subr.mxu0 0.0
    %317 = vmatpush1.msra.mxu0 0.0
    %318 = vmatprep.subr.mxu0 0.0
    %319 = vmatpush1.msra.mxu0 0.0
    %320 = vmatprep.subr.mxu0 0.0
    %321 = vmatpush1.msra.mxu0 0.0
    %322 = vmatprep.subr.mxu0 0.0
    %323 = vmatpush1.msra.mxu0 0.0
    %324 = vmatprep.subr.mxu0 0.0
    %325 = vmatpush1.msra.mxu0 0.0
    %326 = vmatprep.subr.mxu0 %v84
    %327 = vmatpush1.msra.mxu0 %v83
    %328 = vmatprep.subr.mxu0 %v80
    %329 = vmatpush1.msra.mxu0 %v79
    %330 = vmatprep.subr.mxu0 0.0
    %331 = vmatpush2.msra.mxu0 0.0
    %332 = vmatprep.subr.mxu0 0.0
    %333 = vmatpush2.msra.mxu0 0.0
    %334 = vmatprep.subr.mxu0 0.0
    %335 = vmatpush2.msra.mxu0 0.0
    %336 = vmatprep.subr.mxu0 0.0
    %337 = vmatpush2.msra.mxu0 0.0
    %338 = vmatprep.subr.mxu0 0.0
    %339 = vmatpush2.msra.mxu0 0.0
    %340 = vmatprep.subr.mxu0 0.0
    %341 = vmatpush2.msra.mxu0 0.0
    %342 = vmatprep.subr.mxu0 0.0
    %343 = vmatpush2.msra.mxu0 0.0
    %344 = vmatprep.subr.mxu0 0.0
    %345 = vmatpush2.msra.mxu0 0.0
    %346 = vmatprep.subr.mxu0 0.0
    %347 = vmatpush2.msra.mxu0 0.0
    %348 = vmatprep.subr.mxu0 0.0
    %349 = vmatpush2.msra.mxu0 0.0
    %350 = vmatprep.subr.mxu0 0.0
    %351 = vmatpush2.msra.mxu0 0.0
    %352 = vmatprep.subr.mxu0 0.0
    %353 = vmatpush2.msra.mxu0 0.0
    %354 = vmatprep.subr.mxu0 0.0
    %355 = vmatpush2.msra.mxu0 0.0
    %356 = vmatprep.subr.mxu0 0.0
    %357 = vmatpush2.msra.mxu0 0.0
    %358 = vmatprep.subr.mxu0 0.0
    %359 = vmatpush2.msra.mxu0 0.0
    %360 = vmatprep.subr.mxu0 0.0
    %361 = vmatpush2.msra.mxu0 0.0
    %362 = vmatprep.mubr.f32.mxu0 0.0
    %363 = vmatmul.mubr.f32.gmra.mxu0 %v296
    %v364 = vpop.f32.mrf.mxu0
    %v365 = vadd.f32 %v219, %v364
    %v366 = vpop.f32.mrf.mxu0
    %v367 = vadd.f32 %v221, %v366
    %368 = vdwg.mxu0
    %369 = vmatprep.subr.mxu0 0.0
    %370 = vmatpush1.msra.mxu0 0.0
    %371 = vmatprep.subr.mxu0 0.0
    %372 = vmatpush1.msra.mxu0 0.0
    %373 = vmatprep.subr.mxu0 0.0
    %374 = vmatpush1.msra.mxu0 0.0
    %375 = vmatprep.subr.mxu0 0.0
    %376 = vmatpush1.msra.mxu0 0.0
    %377 = vmatprep.subr.mxu0 0.0
    %378 = vmatpush1.msra.mxu0 0.0
    %379 = vmatprep.subr.mxu0 0.0
    %380 = vmatpush1.msra.mxu0 0.0
    %381 = vmatprep.subr.mxu0 0.0
    %382 = vmatpush1.msra.mxu0 0.0
    %383 = vmatprep.subr.mxu0 0.0
    %384 = vmatpush1.msra.mxu0 0.0
    %385 = vmatprep.subr.mxu0 0.0
    %386 = vmatpush1.msra.mxu0 0.0
    %387 = vmatprep.subr.mxu0 0.0
    %388 = vmatpush1.msra.mxu0 0.0
    %389 = vmatprep.subr.mxu0 0.0
    %390 = vmatpush1.msra.mxu0 0.0
    %391 = vmatprep.subr.mxu0 0.0
    %392 = vmatpush1.msra.mxu0 0.0
    %393 = vmatprep.subr.mxu0 0.0
    %394 = vmatpush1.msra.mxu0 0.0
    %395 = vmatprep.subr.mxu0 0.0
    %396 = vmatpush1.msra.mxu0 0.0
    %397 = vmatprep.subr.mxu0 %v86
    %398 = vmatpush1.msra.mxu0 %v85
    %399 = vmatprep.subr.mxu0 %v82
    %400 = vmatpush1.msra.mxu0 %v81
    %401 = vmatprep.subr.mxu0 0.0
    %402 = vmatpush2.msra.mxu0 0.0
    %403 = vmatprep.subr.mxu0 0.0
    %404 = vmatpush2.msra.mxu0 0.0
    %405 = vmatprep.subr.mxu0 0.0
    %406 = vmatpush2.msra.mxu0 0.0
    %407 = vmatprep.subr.mxu0 0.0
    %408 = vmatpush2.msra.mxu0 0.0
    %409 = vmatprep.subr.mxu0 0.0
    %410 = vmatpush2.msra.mxu0 0.0
    %411 = vmatprep.subr.mxu0 0.0
    %412 = vmatpush2.msra.mxu0 0.0
    %413 = vmatprep.subr.mxu0 0.0
    %414 = vmatpush2.msra.mxu0 0.0
    %415 = vmatprep.subr.mxu0 0.0
    %416 = vmatpush2.msra.mxu0 0.0
    %417 = vmatprep.subr.mxu0 0.0
    %418 = vmatpush2.msra.mxu0 0.0
    %419 = vmatprep.subr.mxu0 0.0
    %420 = vmatpush2.msra.mxu0 0.0
    %421 = vmatprep.subr.mxu0 0.0
    %422 = vmatpush2.msra.mxu0 0.0
    %423 = vmatprep.subr.mxu0 0.0
    %424 = vmatpush2.msra.mxu0 0.0
    %425 = vmatprep.subr.mxu0 0.0
    %426 = vmatpush2.msra.mxu0 0.0
    %427 = vmatprep.subr.mxu0 0.0
    %428 = vmatpush2.msra.mxu0 0.0
    %429 = vmatprep.subr.mxu0 0.0
    %430 = vmatpush2.msra.mxu0 0.0
    %431 = vmatprep.subr.mxu0 0.0
    %432 = vmatpush2.msra.mxu0 0.0
    %433 = vmatprep.mubr.f32.mxu0 0.0
    %434 = vmatmul.mubr.f32.gmra.mxu0 %v296
    %v435 = vpop.f32.mrf.mxu0
    %v436 = vadd.f32 %v290, %v435
    %v437 = vpop.f32.mrf.mxu0
    %v438 = vadd.f32 %v292, %v437
    %439 = vdwg.mxu0
    %v440 = vld [vmem:[%s5] sm:$0xf]
    %v442 = vlaneseq
    %v443 = vshrl.u32 %v442, 7
    %v444 = vsub.s32 0, %v443
    %v445 = vrot.slane %v440, %v444
    %v446 = vlaneseq
    %v447 = vshrl.u32 %v446, 7
    %v448 = vsub.s32 1, %v447
    %v449 = vrot.slane %v440, %v448
    %v450 = vlaneseq
    %v451 = vshrl.u32 %v450, 7
    %v452 = vsub.s32 2, %v451
    %v453 = vrot.slane %v440, %v452
    %v454 = vlaneseq
    %v455 = vshrl.u32 %v454, 7
    %v456 = vsub.s32 3, %v455
    %v457 = vrot.slane %v440, %v456
    %v462 = vadd.f32 %v365, %v445
    %v463 = vadd.f32 %v367, %v449
    %v464 = vadd.f32 %v436, %v453
    %v465 = vadd.f32 %v438, %v457
    %v466 = vmul.f32 %v462, 0.5
    %v467 = vtanh.pop %v466
    %v468 = vmul.f32 %v467, 0.5
    %v469 = vadd.f32 %v468, 0.5
    %v470 = vmul.f32 %v463, 0.5
    %v471 = vtanh.pop %v470
    %v472 = vmul.f32 %v471, 0.5
    %v473 = vadd.f32 %v472, 0.5
    %v474 = vtanh.pop %v464
    %v475 = vmul.f32 %v465, 0.5
    %v476 = vtanh.pop %v475
    %v477 = vmul.f32 %v476, 0.5
    %v478 = vadd.f32 %v477, 0.5
    %v479 = vld [vmem:[#allocation5] sm:$0xff]
    %v480 = vmul.f32 %v473, %v479
    %v481 = vmul.f32 %v469, %v474
    %v482 = vadd.f32 %v480, %v481
    %v483 = vtanh.pop %v482
    %v484 = vmul.f32 %v478, %v483
    %485 = vst [vmem:[#allocation10] sm:$0xff] %v484
    %486 = vst [vmem:[#allocation11] sm:$0xff] %v482
    // Predicated region
    $region42: #{tpu_custom_call.1} parent=1 // pred_check
      _
    $region43: #{tpu_custom_call.1} parent=1 // pred_check_branch
      %488 = sbr.rel (0) target = $region45
    $region44: #{tpu_custom_call.1} parent=1 // pred_region
      %s490 = ssub.s32 128, 128
      %491 = vsyncadd [#allocation4], %s490
      %s493 = sshll.u32 [#allocation10], 4
      %s494 = int_to_ptr.vmem [resolvable:$true] %s493
      %496 = dma.vmem_to_hbm [thread:$0]  %s494, 128, %s6, [#allocation4]
    $region45: #{tpu_custom_call.1} parent=1 // pred_fallthru
      _
    // Predicated region
    $region46: #{tpu_custom_call.1} parent=1 // pred_check
      _
    $region47: #{tpu_custom_call.1} parent=1 // pred_check_branch
      %498 = sbr.rel (0) target = $region49
    $region48: #{tpu_custom_call.1} parent=1 // pred_region
      %s500 = ssub.s32 128, 128
      %501 = vsyncadd [#allocation12], %s500
      %s503 = sshll.u32 [#allocation11], 4
      %s504 = int_to_ptr.vmem [resolvable:$true] %s503
      %506 = dma.vmem_to_hbm [thread:$0]  %s504, 128, %s7, [#allocation12]
    $region49: #{tpu_custom_call.1} parent=1 // pred_fallthru
      _
    // Predicated region
    $region50: #{tpu_custom_call.1} parent=1 // pred_check
      _
    $region51: #{tpu_custom_call.1} parent=1 // pred_check_branch
      %508 = sbr.rel (0) target = $region53
    $region52: #{tpu_custom_call.1} parent=1 // pred_region
      %509 = dma.done [#allocation4], 128
    $region53: #{tpu_custom_call.1} parent=1 // pred_fallthru
      _
    // Predicated region
    $region54: #{tpu_custom_call.1} parent=1 // pred_check
      _
    $region55: #{tpu_custom_call.1} parent=1 // pred_check_branch
      %511 = sbr.rel (0) target = $region57
    $region56: #{tpu_custom_call.1} parent=1 // pred_region
      %512 = dma.done [#allocation12], 128
    $region57: #{tpu_custom_call.1} parent=1 // pred_fallthru
      _
    %513 = vsyncpa [#allocation3], 1
    %514 = vsyncpa [#allocation6], 1
    %515 = vsyncpa [#allocation9], 1
    %516 = vsyncpa [#allocation4], 1
    %517 = vsyncpa [#allocation12], 1

</llo_original>
